<compile_context>
chip_gen: v7x
topology: tpu7x:2x2x1
jax: 0.10.0
libtpu: 0.0.40
codegen_flags: <defaults>
</compile_context>

<pallas_src>
import jax
import jax.numpy as jnp
from jax.experimental import pallas as pl
from jax.experimental.pallas import tpu as pltpu

EPS = 1e-5
K = 8  # kernel_size = stride = 8


def _pick_spatial_tile(hw):
    # Largest lane-friendly tile dividing H*W; keeps the (CK, thw) f32 output block
    # (double-buffered) well inside v7x's 64 MiB VMEM at realistic CK.
    for t in (512, 256, 128):
        if hw % t == 0:
            return t
    return hw  # block == full dim is always legal


def deconv_bn_8(x, w, gamma, beta, *, eps=EPS):
    """x: (N, Cin, H, W) NCHW; w: (Cin, Cout, 8, 8) (PyTorch ConvTranspose2d layout);
    gamma/beta: (Cout,).  Returns NCHW (N, Cout, 8H, 8W) with training-mode BN."""
    bsz, cin, hgt, wid = x.shape
    cout = w.shape[1]
    ck = cout * K * K
    hw = hgt * wid
    thw = _pick_spatial_tile(hw)
    n_tiles = hw // thw
    inv_count = 1.0 / float(bsz * hw * K * K)  # 1 / (N * H_out * W_out) -- global, not per-tile

    f32 = jnp.float32
    x3 = x.reshape(bsz, cin, hw).astype(f32)         # pure reshape of NCHW (no transpose)
    wt = w.reshape(cin, ck).T.astype(f32)            # (CK, Cin); row c = (o, kh, kw)
    ch_id = jnp.arange(ck) // (K * K)
    red = (jnp.arange(cout)[:, None] == ch_id[None, :]).astype(f32)  # (Cout, CK) reduce
    exp = red.T                                                      # (CK, Cout) broadcast
    gamma2 = gamma.reshape(cout, 1).astype(f32)
    beta2 = beta.reshape(cout, 1).astype(f32)

    # ---------------- phase 1: BN statistics -> per-column scale / shift -------------
    def stats_kernel(x_ref, wt_ref, red_ref, exp_ref, g_ref, b_ref,
                     scale_ref, shift_ref, sum_acc, sq_acc):
        first = jnp.logical_and(pl.program_id(0) == 0, pl.program_id(1) == 0)
        last = jnp.logical_and(pl.program_id(0) == pl.num_programs(0) - 1,
                               pl.program_id(1) == pl.num_programs(1) - 1)

        @pl.when(first)
        def _():
            sum_acc[...] = jnp.zeros_like(sum_acc)
            sq_acc[...] = jnp.zeros_like(sq_acc)

        # Deconv GEMM for this tile on the MXU: (CK, Cin) @ (Cin, thw).
        y = jnp.dot(wt_ref[...], x_ref[...], preferred_element_type=jnp.float32)
        ones = jnp.ones((y.shape[1], 1), jnp.float32)
        # Spatial reductions on the MXU (ones-matmul), keeping VPU/XLU slots free.
        sum_acc[...] += jnp.dot(y, ones, preferred_element_type=jnp.float32)
        sq_acc[...] += jnp.dot(y * y, ones, preferred_element_type=jnp.float32)

        @pl.when(last)
        def _():
            # Group each channel's 64 tap-rows with a (Cout, CK) one-hot matmul.
            ch_sum = jnp.dot(red_ref[...], sum_acc[...], preferred_element_type=jnp.float32)
            ch_sq = jnp.dot(red_ref[...], sq_acc[...], preferred_element_type=jnp.float32)
            mean = ch_sum * inv_count
            # Note: E[y^2]-E[y]^2 (standard for fused-BN kernels); fine in f32 at these
            # activation magnitudes, slightly less stable than PyTorch's two-pass form.
            var = ch_sq * inv_count - mean * mean
            inv = jax.lax.rsqrt(var + eps)
            sc = g_ref[...] * inv                       # (Cout, 1)
            sh = b_ref[...] - mean * sc                 # (Cout, 1)
            # Broadcast per-channel scale/shift back to the CK tap-rows (MXU).
            scale_ref[...] = jnp.dot(exp_ref[...], sc, preferred_element_type=jnp.float32)
            shift_ref[...] = jnp.dot(exp_ref[...], sh, preferred_element_type=jnp.float32)

    scale_col, shift_col = pl.pallas_call(
        stats_kernel,
        out_shape=(jax.ShapeDtypeStruct((ck, 1), f32),
                   jax.ShapeDtypeStruct((ck, 1), f32)),
        grid=(bsz, n_tiles),
        in_specs=[
            pl.BlockSpec((None, cin, thw), lambda b, t: (b, 0, t)),
            pl.BlockSpec((ck, cin), lambda b, t: (0, 0)),
            pl.BlockSpec((cout, ck), lambda b, t: (0, 0)),
            pl.BlockSpec((ck, cout), lambda b, t: (0, 0)),
            pl.BlockSpec((cout, 1), lambda b, t: (0, 0)),
            pl.BlockSpec((cout, 1), lambda b, t: (0, 0)),
        ],
        out_specs=(pl.BlockSpec((ck, 1), lambda b, t: (0, 0)),
                   pl.BlockSpec((ck, 1), lambda b, t: (0, 0))),
        scratch_shapes=[pltpu.VMEM((ck, 1), jnp.float32),
                        pltpu.VMEM((ck, 1), jnp.float32)],
        compiler_params=pltpu.CompilerParams(
            dimension_semantics=("arbitrary", "arbitrary")),  # global accumulation
    )(x3, wt, red, exp, gamma2, beta2)

    # ---------------- phase 2: deconv GEMM + single-FMA BN epilogue -------------------
    def apply_kernel(x_ref, wt_ref, scale_ref, shift_ref, o_ref):
        y = jnp.dot(wt_ref[...], x_ref[...], preferred_element_type=jnp.float32)  # (CK, thw)
        o_ref[...] = (y * scale_ref[...] + shift_ref[...]).astype(o_ref.dtype)

    y3 = pl.pallas_call(
        apply_kernel,
        out_shape=jax.ShapeDtypeStruct((bsz, ck, hw), f32),
        grid=(bsz, n_tiles),
        in_specs=[
            pl.BlockSpec((None, cin, thw), lambda b, t: (b, 0, t)),
            pl.BlockSpec((ck, cin), lambda b, t: (0, 0)),
            pl.BlockSpec((ck, 1), lambda b, t: (0, 0)),
            pl.BlockSpec((ck, 1), lambda b, t: (0, 0)),
        ],
        out_specs=pl.BlockSpec((None, ck, thw), lambda b, t: (b, 0, t)),
        compiler_params=pltpu.CompilerParams(
            dimension_semantics=("parallel", "parallel")),  # v7x: both TCs take tiles
    )(x3, wt, scale_col, shift_col)

    # Scatter the (kh, kw) tap rows into the 8x-upsampled spatial grid -> NCHW.
    out = y3.reshape(bsz, cout, K, K, hgt, wid)      # (n, o, kh, kw, h, w)
    out = jnp.transpose(out, (0, 1, 4, 2, 5, 3))     # (n, o, h, kh, w, kw)
    return out.reshape(bsz, cout, hgt * K, wid * K)


def ref_deconv_bn(x, w, gamma, beta):
    """Pure-JAX reference for the PyTorch forward (training-mode BN)."""
    y = jnp.einsum("nihw,iokl->nohwkl", x, w)
    n, o, h, wsp, kh, kw = y.shape
    y = jnp.transpose(y, (0, 1, 2, 4, 3, 5)).reshape(n, o, h * kh, wsp * kw)
    mean = jnp.mean(y, axis=(0, 2, 3), keepdims=True)
    var = jnp.mean((y - mean) ** 2, axis=(0, 2, 3), keepdims=True)
    return (y - mean) * jax.lax.rsqrt(var + EPS) * gamma[None, :, None, None] \
        + beta[None, :, None, None]


if __name__ == "__main__":
    key = jax.random.PRNGKey(0)
    k_x, k_w, k_g, k_b = jax.random.split(key, 4)

    N, C_IN, C_OUT, H, W = 2, 4, 4, 16, 16
    x = jax.random.normal(k_x, (N, C_IN, H, W), dtype=jnp.float32)
    # ConvTranspose2d weight shape in PyTorch: (in_channels, out_channels, kH, kW)
    w = 0.1 * jax.random.normal(k_w, (C_IN, C_OUT, K, K), dtype=jnp.float32)
    gamma = 1.0 + 0.1 * jax.random.normal(k_g, (C_OUT,), dtype=jnp.float32)
    beta = 0.1 * jax.random.normal(k_b, (C_OUT,), dtype=jnp.float32)

    out = jax.block_until_ready(deconv_bn_8(x, w, gamma, beta))
    ref = ref_deconv_bn(x, w, gamma, beta)

    assert out.shape == (N, C_OUT, H * K, W * K), out.shape
    err = float(jnp.max(jnp.abs(out - ref)))
    assert jnp.allclose(out, ref, atol=1e-4, rtol=1e-4), err

    print("KERNEL_OK")
</pallas_src>

<mosaic_0001>
module attributes {stable_mosaic.version = 11 : i64} {
  func.func @stats_kernel(%arg0: i32, %arg1: i32, %arg2: memref<1x4x256xf32, #tpu.memory_space<vmem>>, %arg3: memref<256x4xf32, #tpu.memory_space<vmem>>, %arg4: memref<4x256xf32, #tpu.memory_space<vmem>>, %arg5: memref<256x4xf32, #tpu.memory_space<vmem>>, %arg6: memref<4x1xf32, #tpu.memory_space<vmem>>, %arg7: memref<4x1xf32, #tpu.memory_space<vmem>>, %arg8: memref<256x1xf32, #tpu.memory_space<vmem>>, %arg9: memref<256x1xf32, #tpu.memory_space<vmem>>, %arg10: memref<256x1xf32, #tpu.memory_space<vmem>>, %arg11: memref<256x1xf32, #tpu.memory_space<vmem>>) attributes {dimension_semantics = [#tpu.dimension_semantics<arbitrary>, #tpu.dimension_semantics<arbitrary>], iteration_bounds = array<i64: 2, 1>, scalar_prefetch = 0 : i64, scratch_operands = 2 : i64, tpu.core_type = #tpu.core_type<tc>, window_params = [{transform_indices = @transform_0, window_bounds = array<i64: 1, 4, 256>}, {pipeline_mode = #tpu.pipeline_mode<synchronous>, transform_indices = @transform_1, window_bounds = array<i64: 256, 4>}, {pipeline_mode = #tpu.pipeline_mode<synchronous>, transform_indices = @transform_2, window_bounds = array<i64: 4, 256>}, {pipeline_mode = #tpu.pipeline_mode<synchronous>, transform_indices = @transform_3, window_bounds = array<i64: 256, 4>}, {pipeline_mode = #tpu.pipeline_mode<synchronous>, transform_indices = @transform_4, window_bounds = array<i64: 4, 1>}, {pipeline_mode = #tpu.pipeline_mode<synchronous>, transform_indices = @transform_5, window_bounds = array<i64: 4, 1>}, {pipeline_mode = #tpu.pipeline_mode<synchronous>, transform_indices = @transform_6, window_bounds = array<i64: 256, 1>}, {pipeline_mode = #tpu.pipeline_mode<synchronous>, transform_indices = @transform_7, window_bounds = array<i64: 256, 1>}]} {
    %c0_i32 = arith.constant 0 : i32
    %0 = arith.cmpi eq, %arg0, %c0_i32 : i32
    %c0_i32_0 = arith.constant 0 : i32
    %1 = arith.cmpi eq, %arg1, %c0_i32_0 : i32
    %2 = arith.andi %0, %1 : i1
    %c1_i32 = arith.constant 1 : i32
    %3 = arith.cmpi eq, %arg0, %c1_i32 : i32
    %c0_i32_1 = arith.constant 0 : i32
    %4 = arith.cmpi eq, %arg1, %c0_i32_1 : i32
    %5 = arith.andi %3, %4 : i1
    %6 = arith.extui %2 : i1 to i32
    %c0_i32_2 = arith.constant 0 : i32
    %7 = arith.cmpi ne, %6, %c0_i32_2 : i32
    scf.if %7 {
      %cst_19 = arith.constant 0.000000e+00 : f32
      %24 = vector.broadcast %cst_19 : f32 to vector<256x1xf32>
      %c0_20 = arith.constant 0 : index
      %c0_21 = arith.constant 0 : index
      %25 = vector.load %arg10[%c0_20, %c0_21] : memref<256x1xf32, #tpu.memory_space<vmem>>, vector<256x1xf32>
      tpu.vector_store %arg10[%c0_20, %c0_21], %24 {strides = array<i32>} : memref<256x1xf32, #tpu.memory_space<vmem>>, vector<256x1xf32>,
      %cst_22 = arith.constant 0.000000e+00 : f32
      %26 = vector.broadcast %cst_22 : f32 to vector<256x1xf32>
      %c0_23 = arith.constant 0 : index
      %c0_24 = arith.constant 0 : index
      %27 = vector.load %arg11[%c0_23, %c0_24] : memref<256x1xf32, #tpu.memory_space<vmem>>, vector<256x1xf32>
      tpu.vector_store %arg11[%c0_23, %c0_24], %26 {strides = array<i32>} : memref<256x1xf32, #tpu.memory_space<vmem>>, vector<256x1xf32>,
    } else {
    }
    %c0 = arith.constant 0 : index
    %c0_3 = arith.constant 0 : index
    %8 = vector.load %arg3[%c0, %c0_3] : memref<256x4xf32, #tpu.memory_space<vmem>>, vector<256x4xf32>
    %c0_4 = arith.constant 0 : index
    %c0_5 = arith.constant 0 : index
    %c0_6 = arith.constant 0 : index
    %9 = vector.load %arg2[%c0_4, %c0_5, %c0_6] : memref<1x4x256xf32, #tpu.memory_space<vmem>>, vector<1x4x256xf32>
    %10 = vector.shape_cast %9 : vector<1x4x256xf32> to vector<4x256xf32>
    %cst = arith.constant dense<0.000000e+00> : vector<256x256xf32>
    %11 = tpu.matmul %8, %10, %cst {dimension_numbers = #tpu.dot_dimension_numbers<[1], [0], [0], [1], [0, 0, 1, 1], [], []>} : vector<256x4xf32>, vector<4x256xf32>, vector<256x256xf32> -> vector<256x256xf32>
    %cst_7 = arith.constant 1.000000e+00 : f32
    %12 = vector.broadcast %cst_7 : f32 to vector<256x1xf32>
    %c0_8 = arith.constant 0 : index
    %c0_9 = arith.constant 0 : index
    %13 = vector.load %arg10[%c0_8, %c0_9] : memref<256x1xf32, #tpu.memory_space<vmem>>, vector<256x1xf32>
    %cst_10 = arith.constant dense<0.000000e+00> : vector<256x1xf32>
    %14 = tpu.matmul %11, %12, %cst_10 {dimension_numbers = #tpu.dot_dimension_numbers<[1], [0], [0], [1], [0, 0, 1, 1], [], []>} : vector<256x256xf32>, vector<256x1xf32>, vector<256x1xf32> -> vector<256x1xf32>
    %15 = arith.addf %13, %14 : vector<256x1xf32>
    %c0_11 = arith.constant 0 : index
    %c0_12 = arith.constant 0 : index
    %16 = vector.load %arg10[%c0_11, %c0_12] : memref<256x1xf32, #tpu.memory_space<vmem>>, vector<256x1xf32>
    tpu.vector_store %arg10[%c0_11, %c0_12], %15 {strides = array<i32>} : memref<256x1xf32, #tpu.memory_space<vmem>>, vector<256x1xf32>,
    %c0_13 = arith.constant 0 : index
    %c0_14 = arith.constant 0 : index
    %17 = vector.load %arg11[%c0_13, %c0_14] : memref<256x1xf32, #tpu.memory_space<vmem>>, vector<256x1xf32>
    %18 = arith.mulf %11, %11 : vector<256x256xf32>
    %cst_15 = arith.constant dense<0.000000e+00> : vector<256x1xf32>
    %19 = tpu.matmul %18, %12, %cst_15 {dimension_numbers = #tpu.dot_dimension_numbers<[1], [0], [0], [1], [0, 0, 1, 1], [], []>} : vector<256x256xf32>, vector<256x1xf32>, vector<256x1xf32> -> vector<256x1xf32>
    %20 = arith.addf %17, %19 : vector<256x1xf32>
    %c0_16 = arith.constant 0 : index
    %c0_17 = arith.constant 0 : index
    %21 = vector.load %arg11[%c0_16, %c0_17] : memref<256x1xf32, #tpu.memory_space<vmem>>, vector<256x1xf32>
    tpu.vector_store %arg11[%c0_16, %c0_17], %20 {strides = array<i32>} : memref<256x1xf32, #tpu.memory_space<vmem>>, vector<256x1xf32>,
    %22 = arith.extui %5 : i1 to i32
    %c0_i32_18 = arith.constant 0 : i32
    %23 = arith.cmpi ne, %22, %c0_i32_18 : i32
    scf.if %23 {
      %c0_19 = arith.constant 0 : index
      %c0_20 = arith.constant 0 : index
      %24 = vector.load %arg4[%c0_19, %c0_20] : memref<4x256xf32, #tpu.memory_space<vmem>>, vector<4x256xf32>
      %c0_21 = arith.constant 0 : index
      %c0_22 = arith.constant 0 : index
      %25 = vector.load %arg10[%c0_21, %c0_22] : memref<256x1xf32, #tpu.memory_space<vmem>>, vector<256x1xf32>
      %cst_23 = arith.constant dense<0.000000e+00> : vector<4x1xf32>
      %26 = tpu.matmul %24, %25, %cst_23 {dimension_numbers = #tpu.dot_dimension_numbers<[1], [0], [0], [1], [0, 0, 1, 1], [], []>} : vector<4x256xf32>, vector<256x1xf32>, vector<4x1xf32> -> vector<4x1xf32>
      %c0_24 = arith.constant 0 : index
      %c0_25 = arith.constant 0 : index
      %27 = vector.load %arg4[%c0_24, %c0_25] : memref<4x256xf32, #tpu.memory_space<vmem>>, vector<4x256xf32>
      %c0_26 = arith.constant 0 : index
      %c0_27 = arith.constant 0 : index
      %28 = vector.load %arg11[%c0_26, %c0_27] : memref<256x1xf32, #tpu.memory_space<vmem>>, vector<256x1xf32>
      %cst_28 = arith.constant dense<0.000000e+00> : vector<4x1xf32>
      %29 = tpu.matmul %27, %28, %cst_28 {dimension_numbers = #tpu.dot_dimension_numbers<[1], [0], [0], [1], [0, 0, 1, 1], [], []>} : vector<4x256xf32>, vector<256x1xf32>, vector<4x1xf32> -> vector<4x1xf32>
      %cst_29 = arith.constant 3.05175781E-5 : f32
      %30 = vector.broadcast %cst_29 : f32 to vector<4x1xf32>
      %31 = arith.mulf %26, %30 : vector<4x1xf32>
      %cst_30 = arith.constant 3.05175781E-5 : f32
      %32 = vector.broadcast %cst_30 : f32 to vector<4x1xf32>
      %33 = arith.mulf %29, %32 : vector<4x1xf32>
      %34 = arith.mulf %31, %31 : vector<4x1xf32>
      %35 = arith.subf %33, %34 : vector<4x1xf32>
      %cst_31 = arith.constant 9.99999974E-6 : f32
      %36 = vector.broadcast %cst_31 : f32 to vector<4x1xf32>
      %37 = arith.addf %35, %36 : vector<4x1xf32>
      %38 = math.rsqrt %37 : vector<4x1xf32>
      %c0_32 = arith.constant 0 : index
      %c0_33 = arith.constant 0 : index
      %39 = vector.load %arg6[%c0_32, %c0_33] : memref<4x1xf32, #tpu.memory_space<vmem>>, vector<4x1xf32>
      %40 = arith.mulf %39, %38 : vector<4x1xf32>
      %c0_34 = arith.constant 0 : index
      %c0_35 = arith.constant 0 : index
      %41 = vector.load %arg7[%c0_34, %c0_35] : memref<4x1xf32, #tpu.memory_space<vmem>>, vector<4x1xf32>
      %42 = arith.mulf %31, %40 : vector<4x1xf32>
      %43 = arith.subf %41, %42 : vector<4x1xf32>
      %c0_36 = arith.constant 0 : index
      %c0_37 = arith.constant 0 : index
      %44 = vector.load %arg5[%c0_36, %c0_37] : memref<256x4xf32, #tpu.memory_space<vmem>>, vector<256x4xf32>
      %cst_38 = arith.constant dense<0.000000e+00> : vector<256x1xf32>
      %45 = tpu.matmul %44, %40, %cst_38 {dimension_numbers = #tpu.dot_dimension_numbers<[1], [0], [0], [1], [0, 0, 1, 1], [], []>} : vector<256x4xf32>, vector<4x1xf32>, vector<256x1xf32> -> vector<256x1xf32>
      %c0_39 = arith.constant 0 : index
      %c0_40 = arith.constant 0 : index
      %46 = vector.load %arg8[%c0_39, %c0_40] : memref<256x1xf32, #tpu.memory_space<vmem>>, vector<256x1xf32>
      tpu.vector_store %arg8[%c0_39, %c0_40], %45 {strides = array<i32>} : memref<256x1xf32, #tpu.memory_space<vmem>>, vector<256x1xf32>,
      %c0_41 = arith.constant 0 : index
      %c0_42 = arith.constant 0 : index
      %47 = vector.load %arg5[%c0_41, %c0_42] : memref<256x4xf32, #tpu.memory_space<vmem>>, vector<256x4xf32>
      %cst_43 = arith.constant dense<0.000000e+00> : vector<256x1xf32>
      %48 = tpu.matmul %47, %43, %cst_43 {dimension_numbers = #tpu.dot_dimension_numbers<[1], [0], [0], [1], [0, 0, 1, 1], [], []>} : vector<256x4xf32>, vector<4x1xf32>, vector<256x1xf32> -> vector<256x1xf32>
      %c0_44 = arith.constant 0 : index
      %c0_45 = arith.constant 0 : index
      %49 = vector.load %arg9[%c0_44, %c0_45] : memref<256x1xf32, #tpu.memory_space<vmem>>, vector<256x1xf32>
      tpu.vector_store %arg9[%c0_44, %c0_45], %48 {strides = array<i32>} : memref<256x1xf32, #tpu.memory_space<vmem>>, vector<256x1xf32>,
    } else {
    }
    return
  }
  func.func @transform_0(%arg0: i32, %arg1: i32) -> (i32, i32, i32) {
    %c0_i32 = arith.constant 0 : i32
    %c0_i32_0 = arith.constant 0 : i32
    return %arg0, %c0_i32, %arg1 : i32, i32, i32
  }
  func.func @transform_1(%arg0: i32, %arg1: i32) -> (i32, i32) {
    %c0_i32 = arith.constant 0 : i32
    %c0_i32_0 = arith.constant 0 : i32
    %c0_i32_1 = arith.constant 0 : i32
    return %c0_i32, %c0_i32_0 : i32, i32
  }
  func.func @transform_2(%arg0: i32, %arg1: i32) -> (i32, i32) {
    %c0_i32 = arith.constant 0 : i32
    %c0_i32_0 = arith.constant 0 : i32
    %c0_i32_1 = arith.constant 0 : i32
    return %c0_i32, %c0_i32_0 : i32, i32
  }
  func.func @transform_3(%arg0: i32, %arg1: i32) -> (i32, i32) {
    %c0_i32 = arith.constant 0 : i32
    %c0_i32_0 = arith.constant 0 : i32
    %c0_i32_1 = arith.constant 0 : i32
    return %c0_i32, %c0_i32_0 : i32, i32
  }
  func.func @transform_4(%arg0: i32, %arg1: i32) -> (i32, i32) {
    %c0_i32 = arith.constant 0 : i32
    %c0_i32_0 = arith.constant 0 : i32
    %c0_i32_1 = arith.constant 0 : i32
    return %c0_i32, %c0_i32_0 : i32, i32
  }
  func.func @transform_5(%arg0: i32, %arg1: i32) -> (i32, i32) {
    %c0_i32 = arith.constant 0 : i32
    %c0_i32_0 = arith.constant 0 : i32
    %c0_i32_1 = arith.constant 0 : i32
    return %c0_i32, %c0_i32_0 : i32, i32
  }
  func.func @transform_6(%arg0: i32, %arg1: i32) -> (i32, i32) {
    %c0_i32 = arith.constant 0 : i32
    %c0_i32_0 = arith.constant 0 : i32
    %c0_i32_1 = arith.constant 0 : i32
    return %c0_i32, %c0_i32_0 : i32, i32
  }
  func.func @transform_7(%arg0: i32, %arg1: i32) -> (i32, i32) {
    %c0_i32 = arith.constant 0 : i32
    %c0_i32_0 = arith.constant 0 : i32
    %c0_i32_1 = arith.constant 0 : i32
    return %c0_i32, %c0_i32_0 : i32, i32
  }
}

</mosaic_0001>

<llo_original>
// kernel: tpu_custom_call.1
$region0: #{tpu_custom_call.1}
  #allocation0 [shape = 'u32[]', space=smem, size = 0x4, offset = 0x4, fixed_abs, tag = 'smem constant byte address 0x4 - core index']
  #allocation1 [shape = 'u32[144,128]{1,0:T(1,128)}', space=vmem, size = 0x12000, scoped, tag = 'internal scratch']
  #allocation2 [shape = 'f32[256,1]{1,0:T(8,128)}', space=vmem, size = 0x20000, scoped, tag = 'scratch operand']
  #allocation3 [shape = 'f32[256,1]{1,0:T(8,128)}', space=vmem, size = 0x20000, scoped, tag = 'scratch operand']
  %s0 = inlined_call_operand.vmem [shape: f32[2,4,256], index: 0, kind: input, shape index: {}]
  %s1 = inlined_call_operand.vmem [shape: f32[256,4], index: 1, kind: input, shape index: {}]
  %s2 = inlined_call_operand.vmem [shape: f32[4,256], index: 2, kind: input, shape index: {}]
  %s3 = inlined_call_operand.vmem [shape: f32[256,4], index: 3, kind: input, shape index: {}]
  %s4 = inlined_call_operand.vmem [shape: f32[4,1], index: 4, kind: input, shape index: {}]
  %s5 = inlined_call_operand.vmem [shape: f32[4,1], index: 5, kind: input, shape index: {}]
  %s6 = inlined_call_operand.vmem [shape: f32[256,1], index: 6, kind: output, shape index: {0}]
  %s7 = inlined_call_operand.vmem [shape: f32[256,1], index: 7, kind: output, shape index: {1}]
  %8 = xla_tuple %s6, %s7
  %s9 = sld [smem:[#allocation0]]
  $region73: #{tpu_custom_call.1} parent=0
    _
  %s11 = ssub.s32 1, %s9
  %s12 = scalar_select 0, %s11, %s9
  loop: start=0, step=1, limit=4
  $region2: #{tpu_custom_call.1} parent=0 // loop_pre_header
    _
  $region3: #{tpu_custom_call.1} parent=0 // loop_header
    %s14 = sphi 0, %s18
    %p15 = scmp.ge.s32.totalorder %s14, 4
    %s21 = sphi 0, %s33
    %s22 = sphi 0, %s29
    %s23 = sphi 0, %s21
    %s24 = sphi 0, %s22
    %s25 = sphi 0, %s23
    %s26 = sphi 0, %s24
    %s38 = sphi 0, %s40
    %s41 = sphi 0, %s38
    %s42 = sphi 0, %s41
    %s58 = sphi 0, %s42
    %s62 = sphi 0, %s62
    %s64 = sphi 0, %s62
    %s65 = sphi 0, %s64
    %s79 = sphi 0, %s65
    %s83 = sphi 0, %s83
    %s85 = sphi 0, %s83
    %s86 = sphi 0, %s85
    %s100 = sphi 0, %s86
    %s104 = sphi 0, %s104
    %s106 = sphi 0, %s104
    %s107 = sphi 0, %s106
    %s121 = sphi 0, %s107
    %s125 = sphi 0, %s125
    %s127 = sphi 0, %s125
    %s128 = sphi 0, %s127
    %s142 = sphi 0, %s128
    %s146 = sphi 0, %s146
    %s148 = sphi 0, %s146
    %s149 = sphi 0, %s148
    %s163 = sphi 0, %s149
    %s167 = sphi 0, %s167
    %s169 = sphi 0, %s167
    %s170 = sphi 0, %s169
    %s184 = sphi 0, %s170
    %s188 = sphi 0, %s188
    %s190 = sphi 0, %s188
    %s191 = sphi 0, %s190
    %s205 = sphi 0, %s191
  $region4: #{tpu_custom_call.1} parent=0 // loop_header_branch
    %17 = sbr.rel (%p15) target = $region8
  $region5: #{tpu_custom_call.1} parent=0 // loop_body
    %s19 = ssub.s32 %s14, 1
    %s20 = ssub.s32 %s14, 2
    %s27 = sadd.s32 1, %s22
    %p28 = scmp.ge.s32.totalorder %s27, 1
    %s29 = scalar_select %p28, 0, %s27
    %s30 = sadd.s32 1, %s21
    %s31 = scalar_select %p28, %s30, %s21
    %p32 = scmp.ge.s32.totalorder %s31, 2
    %s33 = scalar_select %p32, 0, %s31
    %s34 = ssub.s32 %s21, %s33
    %s35 = ssub.s32 %s22, %s29
    %s36 = sor.u32 %s34, %s35
    %p37 = scmp.eq.s32.totalorder %s36, 0
    %s39 = sadd.s32 %s38, 1
    %s40 = scalar_select %p37, %s38, %s39
    %p43 = pneg %p37
    %p44 = scmp.eq.s32.totalorder %s14, 1
    %p45 = por %p43, %p44
    %p46 = scmp.ne.s32.totalorder %s38, %s41
    %p47 = scmp.eq.s32.totalorder %s14, 0
    %p48 = por %p46, %p47
    %p49 = scmp.ne.s32.totalorder %s38, %s41
    %p50 = scmp.eq.s32.totalorder %s19, 1
    %p51 = por %p49, %p50
    %p52 = scmp.ne.s32.totalorder %s41, %s42
    %p53 = scmp.eq.s32.totalorder %s19, 0
    %p54 = por %p52, %p53
    %p55 = scmp.ne.s32.totalorder %s41, %s42
    %p56 = scmp.eq.s32.totalorder %s20, 1
    %p57 = por %p55, %p56
    %p59 = scmp.ne.s32.totalorder %s42, %s58
    %p60 = scmp.eq.s32.totalorder %s20, 0
    %p61 = por %p59, %p60
    %s63 = sadd.s32 %s62, 1
    %p66 = scmp.eq.s32.totalorder %s14, 1
    %p67 = scmp.ne.s32.totalorder %s62, %s64
    %p68 = scmp.eq.s32.totalorder %s14, 0
    %p69 = por %p67, %p68
    %p70 = scmp.ne.s32.totalorder %s62, %s64
    %p71 = scmp.eq.s32.totalorder %s19, 1
    %p72 = por %p70, %p71
    %p73 = scmp.ne.s32.totalorder %s64, %s65
    %p74 = scmp.eq.s32.totalorder %s19, 0
    %p75 = por %p73, %p74
    %p76 = scmp.ne.s32.totalorder %s64, %s65
    %p77 = scmp.eq.s32.totalorder %s20, 1
    %p78 = por %p76, %p77
    %p80 = scmp.ne.s32.totalorder %s65, %s79
    %p81 = scmp.eq.s32.totalorder %s20, 0
    %p82 = por %p80, %p81
    %s84 = sadd.s32 %s83, 1
    %p87 = scmp.eq.s32.totalorder %s14, 1
    %p88 = scmp.ne.s32.totalorder %s83, %s85
    %p89 = scmp.eq.s32.totalorder %s14, 0
    %p90 = por %p88, %p89
    %p91 = scmp.ne.s32.totalorder %s83, %s85
    %p92 = scmp.eq.s32.totalorder %s19, 1
    %p93 = por %p91, %p92
    %p94 = scmp.ne.s32.totalorder %s85, %s86
    %p95 = scmp.eq.s32.totalorder %s19, 0
    %p96 = por %p94, %p95
    %p97 = scmp.ne.s32.totalorder %s85, %s86
    %p98 = scmp.eq.s32.totalorder %s20, 1
    %p99 = por %p97, %p98
    %p101 = scmp.ne.s32.totalorder %s86, %s100
    %p102 = scmp.eq.s32.totalorder %s20, 0
    %p103 = por %p101, %p102
    %s105 = sadd.s32 %s104, 1
    %p108 = scmp.eq.s32.totalorder %s14, 1
    %p109 = scmp.ne.s32.totalorder %s104, %s106
    %p110 = scmp.eq.s32.totalorder %s14, 0
    %p111 = por %p109, %p110
    %p112 = scmp.ne.s32.totalorder %s104, %s106
    %p113 = scmp.eq.s32.totalorder %s19, 1
    %p114 = por %p112, %p113
    %p115 = scmp.ne.s32.totalorder %s106, %s107
    %p116 = scmp.eq.s32.totalorder %s19, 0
    %p117 = por %p115, %p116
    %p118 = scmp.ne.s32.totalorder %s106, %s107
    %p119 = scmp.eq.s32.totalorder %s20, 1
    %p120 = por %p118, %p119
    %p122 = scmp.ne.s32.totalorder %s107, %s121
    %p123 = scmp.eq.s32.totalorder %s20, 0
    %p124 = por %p122, %p123
    %s126 = sadd.s32 %s125, 1
    %p129 = scmp.eq.s32.totalorder %s14, 1
    %p130 = scmp.ne.s32.totalorder %s125, %s127
    %p131 = scmp.eq.s32.totalorder %s14, 0
    %p132 = por %p130, %p131
    %p133 = scmp.ne.s32.totalorder %s125, %s127
    %p134 = scmp.eq.s32.totalorder %s19, 1
    %p135 = por %p133, %p134
    %p136 = scmp.ne.s32.totalorder %s127, %s128
    %p137 = scmp.eq.s32.totalorder %s19, 0
    %p138 = por %p136, %p137
    %p139 = scmp.ne.s32.totalorder %s127, %s128
    %p140 = scmp.eq.s32.totalorder %s20, 1
    %p141 = por %p139, %p140
    %p143 = scmp.ne.s32.totalorder %s128, %s142
    %p144 = scmp.eq.s32.totalorder %s20, 0
    %p145 = por %p143, %p144
    %s147 = sadd.s32 %s146, 1
    %p150 = scmp.eq.s32.totalorder %s14, 1
    %p151 = scmp.ne.s32.totalorder %s146, %s148
    %p152 = scmp.eq.s32.totalorder %s14, 0
    %p153 = por %p151, %p152
    %p154 = scmp.ne.s32.totalorder %s146, %s148
    %p155 = scmp.eq.s32.totalorder %s19, 1
    %p156 = por %p154, %p155
    %p157 = scmp.ne.s32.totalorder %s148, %s149
    %p158 = scmp.eq.s32.totalorder %s19, 0
    %p159 = por %p157, %p158
    %p160 = scmp.ne.s32.totalorder %s148, %s149
    %p161 = scmp.eq.s32.totalorder %s20, 1
    %p162 = por %p160, %p161
    %p164 = scmp.ne.s32.totalorder %s149, %s163
    %p165 = scmp.eq.s32.totalorder %s20, 0
    %p166 = por %p164, %p165
    %s168 = sadd.s32 %s167, 1
    %p171 = scmp.eq.s32.totalorder %s14, 1
    %p172 = scmp.ne.s32.totalorder %s167, %s169
    %p173 = scmp.eq.s32.totalorder %s14, 0
    %p174 = por %p172, %p173
    %p175 = scmp.ne.s32.totalorder %s167, %s169
    %p176 = scmp.eq.s32.totalorder %s19, 1
    %p177 = por %p175, %p176
    %p178 = scmp.ne.s32.totalorder %s169, %s170
    %p179 = scmp.eq.s32.totalorder %s19, 0
    %p180 = por %p178, %p179
    %p181 = scmp.ne.s32.totalorder %s169, %s170
    %p182 = scmp.eq.s32.totalorder %s20, 1
    %p183 = por %p181, %p182
    %p185 = scmp.ne.s32.totalorder %s170, %s184
    %p186 = scmp.eq.s32.totalorder %s20, 0
    %p187 = por %p185, %p186
    %s189 = sadd.s32 %s188, 1
    %p192 = scmp.eq.s32.totalorder %s14, 1
    %p193 = scmp.ne.s32.totalorder %s188, %s190
    %p194 = scmp.eq.s32.totalorder %s14, 0
    %p195 = por %p193, %p194
    %p196 = scmp.ne.s32.totalorder %s188, %s190
    %p197 = scmp.eq.s32.totalorder %s19, 1
    %p198 = por %p196, %p197
    %p199 = scmp.ne.s32.totalorder %s190, %s191
    %p200 = scmp.eq.s32.totalorder %s19, 0
    %p201 = por %p199, %p200
    %p202 = scmp.ne.s32.totalorder %s190, %s191
    %p203 = scmp.eq.s32.totalorder %s20, 1
    %p204 = por %p202, %p203
    %p206 = scmp.ne.s32.totalorder %s191, %s205
    %p207 = scmp.eq.s32.totalorder %s20, 0
    %p208 = por %p206, %p207
    %p209 = scmp.le.s32.totalorder 1, %s14
    %p210 = scmp.lt.s32.totalorder %s14, 3
    %p211 = pnand %p209, %p210
    %p212 = pneg %p211
    // Predicated region
    $region9: #{tpu_custom_call.1} parent=5 // pred_check
      _
    $region10: #{tpu_custom_call.1} parent=5 // pred_check_branch
      %214 = sbr.rel (%p211) target = $region12
    $region11: #{tpu_custom_call.1} parent=5 // pred_region
      %s215 = ssub.s32 %s14, 1
      // Predicated region
      $region13: #{tpu_custom_call.1} parent=11 // pred_check
        %p216 = pneg %p75
      $region14: #{tpu_custom_call.1} parent=11 // pred_check_branch
        %218 = sbr.rel (%p216) target = $region16
      $region15: #{tpu_custom_call.1} parent=11 // pred_region
        _
      $region16: #{tpu_custom_call.1} parent=11 // pred_fallthru
        _
      // Predicated region
      $region17: #{tpu_custom_call.1} parent=11 // pred_check
        %p219 = pneg %p96
      $region18: #{tpu_custom_call.1} parent=11 // pred_check_branch
        %221 = sbr.rel (%p219) target = $region20
      $region19: #{tpu_custom_call.1} parent=11 // pred_region
        _
      $region20: #{tpu_custom_call.1} parent=11 // pred_fallthru
        _
      // Predicated region
      $region21: #{tpu_custom_call.1} parent=11 // pred_check
        %p222 = pneg %p117
      $region22: #{tpu_custom_call.1} parent=11 // pred_check_branch
        %224 = sbr.rel (%p222) target = $region24
      $region23: #{tpu_custom_call.1} parent=11 // pred_region
        _
      $region24: #{tpu_custom_call.1} parent=11 // pred_fallthru
        _
      // Predicated region
      $region25: #{tpu_custom_call.1} parent=11 // pred_check
        %p225 = pneg %p138
      $region26: #{tpu_custom_call.1} parent=11 // pred_check_branch
        %227 = sbr.rel (%p225) target = $region28
      $region27: #{tpu_custom_call.1} parent=11 // pred_region
        _
      $region28: #{tpu_custom_call.1} parent=11 // pred_fallthru
        _
      // Predicated region
      $region29: #{tpu_custom_call.1} parent=11 // pred_check
        %p228 = pneg %p159
      $region30: #{tpu_custom_call.1} parent=11 // pred_check_branch
        %230 = sbr.rel (%p228) target = $region32
      $region31: #{tpu_custom_call.1} parent=11 // pred_region
        _
      $region32: #{tpu_custom_call.1} parent=11 // pred_fallthru
        _
    $region12: #{tpu_custom_call.1} parent=5 // pred_fallthru
      _
    %p231 = scmp.lt.s32.totalorder %s14, 2
    // Predicated region
    $region33: #{tpu_custom_call.1} parent=5 // pred_check
      %p232 = pneg %p231
    $region34: #{tpu_custom_call.1} parent=5 // pred_check_branch
      %234 = sbr.rel (%p232) target = $region36
    $region35: #{tpu_custom_call.1} parent=5 // pred_region
      // Predicated region
      $region37: #{tpu_custom_call.1} parent=35 // pred_check
        %p235 = pneg %p48
      $region38: #{tpu_custom_call.1} parent=35 // pred_check_branch
        %237 = sbr.rel (%p235) target = $region40
      $region39: #{tpu_custom_call.1} parent=35 // pred_region
        %s238 = smul.u32 2, %s22
        %p239 = scmp.lt.s32.totalorder %s21, 1
        %s240 = scalar_select %p239, %s21, 1
        %p241 = scmp.lt.s32.totalorder %s238, 1
        %s242 = scalar_select %p241, %s238, 1
        %s243 = smul.addr %s240, 2
        %s244 = sadd.s32 %s242, %s243
        %s245 = smul.addr %s244, 4
        %s246 = scalar_lea.vmem %s0, %s245
        %s247 = smul.u32 2, %s22
      $region40: #{tpu_custom_call.1} parent=35 // pred_fallthru
        _
    $region36: #{tpu_custom_call.1} parent=5 // pred_fallthru
      _
    %p248 = scmp.le.s32.totalorder 1, %s14
    %p249 = scmp.lt.s32.totalorder %s14, 3
    %p250 = pnand %p248, %p249
    %p251 = pneg %p250
    // Predicated region
    $region41: #{tpu_custom_call.1} parent=5 // pred_check
      _
    $region42: #{tpu_custom_call.1} parent=5 // pred_check_branch
      %253 = sbr.rel (%p250) target = $region44
    $region43: #{tpu_custom_call.1} parent=5 // pred_region
      %s254 = ssub.s32 %s14, 1
      %s255 = smul.u32 2, %s24
      %p256 = scmp.lt.s32.totalorder %s23, 1
      %s257 = scalar_select %p256, %s23, 1
      %p258 = scmp.lt.s32.totalorder %s255, 1
      %s259 = scalar_select %p258, %s255, 1
      %s260 = smul.addr %s257, 2
      %s261 = sadd.s32 %s259, %s260
      %s262 = smul.addr %s261, 4
      %s263 = scalar_lea.vmem %s0, %s262
      %p264 = pneg %p54
      %p265 = pneg %p51
      %p266 = pneg %p75
      %p267 = pneg %p72
      %p268 = pneg %p96
      %p269 = pneg %p93
      %p270 = pneg %p117
      %p271 = pneg %p114
      %p272 = pneg %p138
      %p273 = pneg %p135
      %p274 = pneg %p159
      %p275 = pneg %p156
      %p276 = pneg %p180
      %p277 = pneg %p177
      %p278 = pneg %p201
      %p279 = pneg %p198
      %s280 = smul.u32 2, %s24
      %p281 = scmp.lt.s32.totalorder %s23, 1
      %s282 = scalar_select %p281, %s23, 1
      %p283 = scmp.lt.s32.totalorder %s280, 1
      %s284 = scalar_select %p283, %s280, 1
      %s285 = smul.addr %s282, 2
      %s286 = sadd.s32 %s284, %s285
      %s287 = smul.addr %s286, 4
      %s288 = scalar_lea.vmem %s0, %s287
      %s289 = smul.u32 2, %s24
      %p290 = scmp.eq.s32.totalorder %s23, 0
      %p291 = scmp.eq.s32.totalorder %s24, 0
      %p292 = pnand %p290, %p291
      %p293 = pneg %p292
      %p294 = scmp.eq.s32.totalorder %s23, 1
      %p295 = pnand %p294, %p291
      %p296 = pneg %p295
      // Predicated region
      $region45: #{tpu_custom_call.1} parent=43 // pred_check
        _
      $region46: #{tpu_custom_call.1} parent=43 // pred_check_branch
        %298 = sbr.rel (%p292) target = $region48
      $region47: #{tpu_custom_call.1} parent=43 // pred_region
        %vm299 = vcmask 7168
        %300 = vst.msk [vmem:[#allocation2] sm:$0xff] %vm299, 0.0
        %301 = vst.msk [vmem:[#allocation2 + $0x8] sm:$0xff] %vm299, 0.0
        %302 = vst.msk [vmem:[#allocation2 + $0x10] sm:$0xff] %vm299, 0.0
        %303 = vst.msk [vmem:[#allocation2 + $0x18] sm:$0xff] %vm299, 0.0
        %304 = vst.msk [vmem:[#allocation2 + $0x20] sm:$0xff] %vm299, 0.0
        %305 = vst.msk [vmem:[#allocation2 + $0x28] sm:$0xff] %vm299, 0.0
        %306 = vst.msk [vmem:[#allocation2 + $0x30] sm:$0xff] %vm299, 0.0
        %307 = vst.msk [vmem:[#allocation2 + $0x38] sm:$0xff] %vm299, 0.0
        %308 = vst.msk [vmem:[#allocation2 + $0x40] sm:$0xff] %vm299, 0.0
        %309 = vst.msk [vmem:[#allocation2 + $0x48] sm:$0xff] %vm299, 0.0
        %310 = vst.msk [vmem:[#allocation2 + $0x50] sm:$0xff] %vm299, 0.0
        %311 = vst.msk [vmem:[#allocation2 + $0x58] sm:$0xff] %vm299, 0.0
        %312 = vst.msk [vmem:[#allocation2 + $0x60] sm:$0xff] %vm299, 0.0
        %313 = vst.msk [vmem:[#allocation2 + $0x68] sm:$0xff] %vm299, 0.0
        %314 = vst.msk [vmem:[#allocation2 + $0x70] sm:$0xff] %vm299, 0.0
        %315 = vst.msk [vmem:[#allocation2 + $0x78] sm:$0xff] %vm299, 0.0
        %316 = vst.msk [vmem:[#allocation2 + $0x80] sm:$0xff] %vm299, 0.0
        %317 = vst.msk [vmem:[#allocation2 + $0x88] sm:$0xff] %vm299, 0.0
        %318 = vst.msk [vmem:[#allocation2 + $0x90] sm:$0xff] %vm299, 0.0
        %319 = vst.msk [vmem:[#allocation2 + $0x98] sm:$0xff] %vm299, 0.0
        %320 = vst.msk [vmem:[#allocation2 + $0xa0] sm:$0xff] %vm299, 0.0
        %321 = vst.msk [vmem:[#allocation2 + $0xa8] sm:$0xff] %vm299, 0.0
        %322 = vst.msk [vmem:[#allocation2 + $0xb0] sm:$0xff] %vm299, 0.0
        %323 = vst.msk [vmem:[#allocation2 + $0xb8] sm:$0xff] %vm299, 0.0
        %324 = vst.msk [vmem:[#allocation2 + $0xc0] sm:$0xff] %vm299, 0.0
        %325 = vst.msk [vmem:[#allocation2 + $0xc8] sm:$0xff] %vm299, 0.0
        %326 = vst.msk [vmem:[#allocation2 + $0xd0] sm:$0xff] %vm299, 0.0
        %327 = vst.msk [vmem:[#allocation2 + $0xd8] sm:$0xff] %vm299, 0.0
        %328 = vst.msk [vmem:[#allocation2 + $0xe0] sm:$0xff] %vm299, 0.0
        %329 = vst.msk [vmem:[#allocation2 + $0xe8] sm:$0xff] %vm299, 0.0
        %330 = vst.msk [vmem:[#allocation2 + $0xf0] sm:$0xff] %vm299, 0.0
        %331 = vst.msk [vmem:[#allocation2 + $0xf8] sm:$0xff] %vm299, 0.0
        %332 = vst.msk [vmem:[#allocation3] sm:$0xff] %vm299, 0.0
        %333 = vst.msk [vmem:[#allocation3 + $0x8] sm:$0xff] %vm299, 0.0
        %334 = vst.msk [vmem:[#allocation3 + $0x10] sm:$0xff] %vm299, 0.0
        %335 = vst.msk [vmem:[#allocation3 + $0x18] sm:$0xff] %vm299, 0.0
        %336 = vst.msk [vmem:[#allocation3 + $0x20] sm:$0xff] %vm299, 0.0
        %337 = vst.msk [vmem:[#allocation3 + $0x28] sm:$0xff] %vm299, 0.0
        %338 = vst.msk [vmem:[#allocation3 + $0x30] sm:$0xff] %vm299, 0.0
        %339 = vst.msk [vmem:[#allocation3 + $0x38] sm:$0xff] %vm299, 0.0
        %340 = vst.msk [vmem:[#allocation3 + $0x40] sm:$0xff] %vm299, 0.0
        %341 = vst.msk [vmem:[#allocation3 + $0x48] sm:$0xff] %vm299, 0.0
        %342 = vst.msk [vmem:[#allocation3 + $0x50] sm:$0xff] %vm299, 0.0
        %343 = vst.msk [vmem:[#allocation3 + $0x58] sm:$0xff] %vm299, 0.0
        %344 = vst.msk [vmem:[#allocation3 + $0x60] sm:$0xff] %vm299, 0.0
        %345 = vst.msk [vmem:[#allocation3 + $0x68] sm:$0xff] %vm299, 0.0
        %346 = vst.msk [vmem:[#allocation3 + $0x70] sm:$0xff] %vm299, 0.0
        %347 = vst.msk [vmem:[#allocation3 + $0x78] sm:$0xff] %vm299, 0.0
        %348 = vst.msk [vmem:[#allocation3 + $0x80] sm:$0xff] %vm299, 0.0
        %349 = vst.msk [vmem:[#allocation3 + $0x88] sm:$0xff] %vm299, 0.0
        %350 = vst.msk [vmem:[#allocation3 + $0x90] sm:$0xff] %vm299, 0.0
        %351 = vst.msk [vmem:[#allocation3 + $0x98] sm:$0xff] %vm299, 0.0
        %352 = vst.msk [vmem:[#allocation3 + $0xa0] sm:$0xff] %vm299, 0.0
        %353 = vst.msk [vmem:[#allocation3 + $0xa8] sm:$0xff] %vm299, 0.0
        %354 = vst.msk [vmem:[#allocation3 + $0xb0] sm:$0xff] %vm299, 0.0
        %355 = vst.msk [vmem:[#allocation3 + $0xb8] sm:$0xff] %vm299, 0.0
        %356 = vst.msk [vmem:[#allocation3 + $0xc0] sm:$0xff] %vm299, 0.0
        %357 = vst.msk [vmem:[#allocation3 + $0xc8] sm:$0xff] %vm299, 0.0
        %358 = vst.msk [vmem:[#allocation3 + $0xd0] sm:$0xff] %vm299, 0.0
        %359 = vst.msk [vmem:[#allocation3 + $0xd8] sm:$0xff] %vm299, 0.0
        %360 = vst.msk [vmem:[#allocation3 + $0xe0] sm:$0xff] %vm299, 0.0
        %361 = vst.msk [vmem:[#allocation3 + $0xe8] sm:$0xff] %vm299, 0.0
        %362 = vst.msk [vmem:[#allocation3 + $0xf0] sm:$0xff] %vm299, 0.0
        %363 = vst.msk [vmem:[#allocation3 + $0xf8] sm:$0xff] %vm299, 0.0
      $region48: #{tpu_custom_call.1} parent=43 // pred_fallthru
        _
      %v364 = vld [vmem:[%s1] sm:$0xff]
      %v365 = vld [vmem:[%s1 + $0x8] sm:$0xff]
      %v366 = vld [vmem:[%s1 + $0x10] sm:$0xff]
      %v367 = vld [vmem:[%s1 + $0x18] sm:$0xff]
      %v368 = vld [vmem:[%s1 + $0x20] sm:$0xff]
      %v369 = vld [vmem:[%s1 + $0x28] sm:$0xff]
      %v370 = vld [vmem:[%s1 + $0x30] sm:$0xff]
      %v371 = vld [vmem:[%s1 + $0x38] sm:$0xff]
      %v372 = vld [vmem:[%s1 + $0x40] sm:$0xff]
      %v373 = vld [vmem:[%s1 + $0x48] sm:$0xff]
      %v374 = vld [vmem:[%s1 + $0x50] sm:$0xff]
      %v375 = vld [vmem:[%s1 + $0x58] sm:$0xff]
      %v376 = vld [vmem:[%s1 + $0x60] sm:$0xff]
      %v377 = vld [vmem:[%s1 + $0x68] sm:$0xff]
      %v378 = vld [vmem:[%s1 + $0x70] sm:$0xff]
      %v379 = vld [vmem:[%s1 + $0x78] sm:$0xff]
      %v380 = vld [vmem:[%s1 + $0x80] sm:$0xff]
      %v381 = vld [vmem:[%s1 + $0x88] sm:$0xff]
      %v382 = vld [vmem:[%s1 + $0x90] sm:$0xff]
      %v383 = vld [vmem:[%s1 + $0x98] sm:$0xff]
      %v384 = vld [vmem:[%s1 + $0xa0] sm:$0xff]
      %v385 = vld [vmem:[%s1 + $0xa8] sm:$0xff]
      %v386 = vld [vmem:[%s1 + $0xb0] sm:$0xff]
      %v387 = vld [vmem:[%s1 + $0xb8] sm:$0xff]
      %v388 = vld [vmem:[%s1 + $0xc0] sm:$0xff]
      %v389 = vld [vmem:[%s1 + $0xc8] sm:$0xff]
      %v390 = vld [vmem:[%s1 + $0xd0] sm:$0xff]
      %v391 = vld [vmem:[%s1 + $0xd8] sm:$0xff]
      %v392 = vld [vmem:[%s1 + $0xe0] sm:$0xff]
      %v393 = vld [vmem:[%s1 + $0xe8] sm:$0xff]
      %v394 = vld [vmem:[%s1 + $0xf0] sm:$0xff]
      %v395 = vld [vmem:[%s1 + $0xf8] sm:$0xff]
      %v396 = vld [vmem:[%s288] sm:$0xff]
      %v398 = vcombine.high %v396, %v396
      %vm399 = vcmask 31744
      %v401 = vsel %vm399, %v364, 0
      %v404 = vsel %vm399, %v365, 0
      %v407 = vsel %vm399, %v366, 0
      %v410 = vsel %vm399, %v367, 0
      %v413 = vsel %vm399, %v368, 0
      %v416 = vsel %vm399, %v369, 0
      %v419 = vsel %vm399, %v370, 0
      %v422 = vsel %vm399, %v371, 0
      %v425 = vsel %vm399, %v372, 0
      %v428 = vsel %vm399, %v373, 0
      %v431 = vsel %vm399, %v374, 0
      %v434 = vsel %vm399, %v375, 0
      %v437 = vsel %vm399, %v376, 0
      %v440 = vsel %vm399, %v377, 0
      %v443 = vsel %vm399, %v378, 0
      %v446 = vsel %vm399, %v379, 0
      %v449 = vsel %vm399, %v380, 0
      %v452 = vsel %vm399, %v381, 0
      %v455 = vsel %vm399, %v382, 0
      %v458 = vsel %vm399, %v383, 0
      %v461 = vsel %vm399, %v384, 0
      %v464 = vsel %vm399, %v385, 0
      %v467 = vsel %vm399, %v386, 0
      %v470 = vsel %vm399, %v387, 0
      %v473 = vsel %vm399, %v388, 0
      %v476 = vsel %vm399, %v389, 0
      %v479 = vsel %vm399, %v390, 0
      %v482 = vsel %vm399, %v391, 0
      %v485 = vsel %vm399, %v392, 0
      %v488 = vsel %vm399, %v393, 0
      %v491 = vsel %vm399, %v394, 0
      %v494 = vsel %vm399, %v395, 0
      %vm496 = vcmask 1043456
      %v497 = vsel %vm496, %v396, 0
      %v499 = vsel %vm496, %v398, 0
      %501 = vmatprep.subr.mxu0 %v499
      %502 = vmatpush1.msra.mxu0 %v497
      %503 = vmatprep.subr.mxu0 0.0
      %504 = vmatpush1.msra.mxu0 0.0
      %505 = vmatprep.subr.mxu0 0.0
      %506 = vmatpush1.msra.mxu0 0.0
      %507 = vmatprep.subr.mxu0 0.0
      %508 = vmatpush1.msra.mxu0 0.0
      %509 = vmatprep.subr.mxu0 0.0
      %510 = vmatpush1.msra.mxu0 0.0
      %511 = vmatprep.subr.mxu0 0.0
      %512 = vmatpush1.msra.mxu0 0.0
      %513 = vmatprep.subr.mxu0 0.0
      %514 = vmatpush1.msra.mxu0 0.0
      %515 = vmatprep.subr.mxu0 0.0
      %516 = vmatpush1.msra.mxu0 0.0
      %517 = vmatprep.subr.mxu0 0.0
      %518 = vmatpush1.msra.mxu0 0.0
      %519 = vmatprep.subr.mxu0 0.0
      %520 = vmatpush1.msra.mxu0 0.0
      %521 = vmatprep.subr.mxu0 0.0
      %522 = vmatpush1.msra.mxu0 0.0
      %523 = vmatprep.subr.mxu0 0.0
      %524 = vmatpush1.msra.mxu0 0.0
      %525 = vmatprep.subr.mxu0 0.0
      %526 = vmatpush1.msra.mxu0 0.0
      %527 = vmatprep.subr.mxu0 0.0
      %528 = vmatpush1.msra.mxu0 0.0
      %529 = vmatprep.subr.mxu0 0.0
      %530 = vmatpush1.msra.mxu0 0.0
      %531 = vmatprep.subr.mxu0 0.0
      %532 = vmatpush1.msra.mxu0 0.0
      %533 = vmatprep.subr.mxu0 0.0
      %534 = vmatpush1.msra.mxu0 0.0
      %535 = vmatprep.subr.mxu0 0.0
      %536 = vmatpush1.msra.mxu0 0.0
      %537 = vmatprep.subr.mxu0 0.0
      %538 = vmatpush1.msra.mxu0 0.0
      %539 = vmatprep.subr.mxu0 0.0
      %540 = vmatpush1.msra.mxu0 0.0
      %541 = vmatprep.subr.mxu0 0.0
      %542 = vmatpush1.msra.mxu0 0.0
      %543 = vmatprep.subr.mxu0 0.0
      %544 = vmatpush1.msra.mxu0 0.0
      %545 = vmatprep.subr.mxu0 0.0
      %546 = vmatpush1.msra.mxu0 0.0
      %547 = vmatprep.subr.mxu0 0.0
      %548 = vmatpush1.msra.mxu0 0.0
      %549 = vmatprep.subr.mxu0 0.0
      %550 = vmatpush1.msra.mxu0 0.0
      %551 = vmatprep.subr.mxu0 0.0
      %552 = vmatpush1.msra.mxu0 0.0
      %553 = vmatprep.subr.mxu0 0.0
      %554 = vmatpush1.msra.mxu0 0.0
      %555 = vmatprep.subr.mxu0 0.0
      %556 = vmatpush1.msra.mxu0 0.0
      %557 = vmatprep.subr.mxu0 0.0
      %558 = vmatpush1.msra.mxu0 0.0
      %559 = vmatprep.subr.mxu0 0.0
      %560 = vmatpush1.msra.mxu0 0.0
      %561 = vmatprep.subr.mxu0 0.0
      %562 = vmatpush1.msra.mxu0 0.0
      %563 = vmatprep.subr.mxu0 0.0
      %564 = vmatpush1.msra.mxu0 0.0
      %565 = vmatprep.mubr.f32.mxu0 0.0
      %566 = vmatmul.mubr.f32.gmra.mrb[0].mxu0 %v401
      %v567 = vpop.f32.mrb[0].mxu0
      %v568 = vadd.f32 0.0, %v567
      %v569 = vpop.f32.mrb[0].mxu0
      %v570 = vadd.f32 0.0, %v569
      %571 = vmatprep.mubr.f32.mxu0 0.0
      %572 = vmatmul.mubr.f32.gmra.mrb[0].mxu0 %v404
      %v573 = vpop.f32.mrb[0].mxu0
      %v574 = vadd.f32 0.0, %v573
      %v575 = vpop.f32.mrb[0].mxu0
      %v576 = vadd.f32 0.0, %v575
      %577 = vmatprep.mubr.f32.mxu0 0.0
      %578 = vmatmul.mubr.f32.gmra.mrb[0].mxu0 %v407
      %v579 = vpop.f32.mrb[0].mxu0
      %v580 = vadd.f32 0.0, %v579
      %v581 = vpop.f32.mrb[0].mxu0
      %v582 = vadd.f32 0.0, %v581
      %583 = vmatprep.mubr.f32.mxu0 0.0
      %584 = vmatmul.mubr.f32.gmra.mrb[0].mxu0 %v410
      %v585 = vpop.f32.mrb[0].mxu0
      %v586 = vadd.f32 0.0, %v585
      %v587 = vpop.f32.mrb[0].mxu0
      %v588 = vadd.f32 0.0, %v587
      %589 = vmatprep.mubr.f32.mxu0 0.0
      %590 = vmatmul.mubr.f32.gmra.mrb[0].mxu0 %v413
      %v591 = vpop.f32.mrb[0].mxu0
      %v592 = vadd.f32 0.0, %v591
      %v593 = vpop.f32.mrb[0].mxu0
      %v594 = vadd.f32 0.0, %v593
      %595 = vmatprep.mubr.f32.mxu0 0.0
      %596 = vmatmul.mubr.f32.gmra.mrb[0].mxu0 %v416
      %v597 = vpop.f32.mrb[0].mxu0
      %v598 = vadd.f32 0.0, %v597
      %v599 = vpop.f32.mrb[0].mxu0
      %v600 = vadd.f32 0.0, %v599
      %601 = vmatprep.mubr.f32.mxu0 0.0
      %602 = vmatmul.mubr.f32.gmra.mrb[0].mxu0 %v419
      %v603 = vpop.f32.mrb[0].mxu0
      %v604 = vadd.f32 0.0, %v603
      %v605 = vpop.f32.mrb[0].mxu0
      %v606 = vadd.f32 0.0, %v605
      %607 = vmatprep.mubr.f32.mxu0 0.0
      %608 = vmatmul.mubr.f32.gmra.mrb[0].mxu0 %v422
      %v609 = vpop.f32.mrb[0].mxu0
      %v610 = vadd.f32 0.0, %v609
      %v611 = vpop.f32.mrb[0].mxu0
      %v612 = vadd.f32 0.0, %v611
      %613 = vmatprep.mubr.f32.mxu0 0.0
      %614 = vmatmul.mubr.f32.gmra.mrb[0].mxu0 %v425
      %v615 = vpop.f32.mrb[0].mxu0
      %v616 = vadd.f32 0.0, %v615
      %v617 = vpop.f32.mrb[0].mxu0
      %v618 = vadd.f32 0.0, %v617
      %619 = vmatprep.mubr.f32.mxu0 0.0
      %620 = vmatmul.mubr.f32.gmra.mrb[0].mxu0 %v428
      %v621 = vpop.f32.mrb[0].mxu0
      %v622 = vadd.f32 0.0, %v621
      %v623 = vpop.f32.mrb[0].mxu0
      %v624 = vadd.f32 0.0, %v623
      %625 = vmatprep.mubr.f32.mxu0 0.0
      %626 = vmatmul.mubr.f32.gmra.mrb[0].mxu0 %v431
      %v627 = vpop.f32.mrb[0].mxu0
      %v628 = vadd.f32 0.0, %v627
      %v629 = vpop.f32.mrb[0].mxu0
      %v630 = vadd.f32 0.0, %v629
      %631 = vmatprep.mubr.f32.mxu0 0.0
      %632 = vmatmul.mubr.f32.gmra.mrb[0].mxu0 %v434
      %v633 = vpop.f32.mrb[0].mxu0
      %v634 = vadd.f32 0.0, %v633
      %v635 = vpop.f32.mrb[0].mxu0
      %v636 = vadd.f32 0.0, %v635
      %637 = vmatprep.mubr.f32.mxu0 0.0
      %638 = vmatmul.mubr.f32.gmra.mrb[0].mxu0 %v437
      %v639 = vpop.f32.mrb[0].mxu0
      %v640 = vadd.f32 0.0, %v639
      %v641 = vpop.f32.mrb[0].mxu0
      %v642 = vadd.f32 0.0, %v641
      %643 = vmatprep.mubr.f32.mxu0 0.0
      %644 = vmatmul.mubr.f32.gmra.mrb[0].mxu0 %v440
      %v645 = vpop.f32.mrb[0].mxu0
      %v646 = vadd.f32 0.0, %v645
      %v647 = vpop.f32.mrb[0].mxu0
      %v648 = vadd.f32 0.0, %v647
      %649 = vmatprep.mubr.f32.mxu0 0.0
      %650 = vmatmul.mubr.f32.gmra.mrb[0].mxu0 %v443
      %v651 = vpop.f32.mrb[0].mxu0
      %v652 = vadd.f32 0.0, %v651
      %v653 = vpop.f32.mrb[0].mxu0
      %v654 = vadd.f32 0.0, %v653
      %655 = vmatprep.mubr.f32.mxu0 0.0
      %656 = vmatmul.mubr.f32.gmra.mrb[0].mxu0 %v446
      %v657 = vpop.f32.mrb[0].mxu0
      %v658 = vadd.f32 0.0, %v657
      %v659 = vpop.f32.mrb[0].mxu0
      %v660 = vadd.f32 0.0, %v659
      %661 = vmatprep.mubr.f32.mxu0 0.0
      %662 = vmatmul.mubr.f32.gmra.mrb[0].mxu0 %v449
      %v663 = vpop.f32.mrb[0].mxu0
      %v664 = vadd.f32 0.0, %v663
      %v665 = vpop.f32.mrb[0].mxu0
      %v666 = vadd.f32 0.0, %v665
      %667 = vmatprep.mubr.f32.mxu0 0.0
      %668 = vmatmul.mubr.f32.gmra.mrb[0].mxu0 %v452
      %v669 = vpop.f32.mrb[0].mxu0
      %v670 = vadd.f32 0.0, %v669
      %v671 = vpop.f32.mrb[0].mxu0
      %v672 = vadd.f32 0.0, %v671
      %673 = vmatprep.mubr.f32.mxu0 0.0
      %674 = vmatmul.mubr.f32.gmra.mrb[0].mxu0 %v455
      %v675 = vpop.f32.mrb[0].mxu0
      %v676 = vadd.f32 0.0, %v675
      %v677 = vpop.f32.mrb[0].mxu0
      %v678 = vadd.f32 0.0, %v677
      %679 = vmatprep.mubr.f32.mxu0 0.0
      %680 = vmatmul.mubr.f32.gmra.mrb[0].mxu0 %v458
      %v681 = vpop.f32.mrb[0].mxu0
      %v682 = vadd.f32 0.0, %v681
      %v683 = vpop.f32.mrb[0].mxu0
      %v684 = vadd.f32 0.0, %v683
      %685 = vmatprep.mubr.f32.mxu0 0.0
      %686 = vmatmul.mubr.f32.gmra.mrb[0].mxu0 %v461
      %v687 = vpop.f32.mrb[0].mxu0
      %v688 = vadd.f32 0.0, %v687
      %v689 = vpop.f32.mrb[0].mxu0
      %v690 = vadd.f32 0.0, %v689
      %691 = vmatprep.mubr.f32.mxu0 0.0
      %692 = vmatmul.mubr.f32.gmra.mrb[0].mxu0 %v464
      %v693 = vpop.f32.mrb[0].mxu0
      %v694 = vadd.f32 0.0, %v693
      %v695 = vpop.f32.mrb[0].mxu0
      %v696 = vadd.f32 0.0, %v695
      %697 = vmatprep.mubr.f32.mxu0 0.0
      %698 = vmatmul.mubr.f32.gmra.mrb[0].mxu0 %v467
      %v699 = vpop.f32.mrb[0].mxu0
      %v700 = vadd.f32 0.0, %v699
      %v701 = vpop.f32.mrb[0].mxu0
      %v702 = vadd.f32 0.0, %v701
      %703 = vmatprep.mubr.f32.mxu0 0.0
      %704 = vmatmul.mubr.f32.gmra.mrb[0].mxu0 %v470
      %v705 = vpop.f32.mrb[0].mxu0
      %v706 = vadd.f32 0.0, %v705
      %v707 = vpop.f32.mrb[0].mxu0
      %v708 = vadd.f32 0.0, %v707
      %709 = vmatprep.mubr.f32.mxu0 0.0
      %710 = vmatmul.mubr.f32.gmra.mrb[0].mxu0 %v473
      %v711 = vpop.f32.mrb[0].mxu0
      %v712 = vadd.f32 0.0, %v711
      %v713 = vpop.f32.mrb[0].mxu0
      %v714 = vadd.f32 0.0, %v713
      %715 = vmatprep.mubr.f32.mxu0 0.0
      %716 = vmatmul.mubr.f32.gmra.mrb[0].mxu0 %v476
      %v717 = vpop.f32.mrb[0].mxu0
      %v718 = vadd.f32 0.0, %v717
      %v719 = vpop.f32.mrb[0].mxu0
      %v720 = vadd.f32 0.0, %v719
      %721 = vmatprep.mubr.f32.mxu0 0.0
      %722 = vmatmul.mubr.f32.gmra.mrb[0].mxu0 %v479
      %v723 = vpop.f32.mrb[0].mxu0
      %v724 = vadd.f32 0.0, %v723
      %v725 = vpop.f32.mrb[0].mxu0
      %v726 = vadd.f32 0.0, %v725
      %727 = vmatprep.mubr.f32.mxu0 0.0
      %728 = vmatmul.mubr.f32.gmra.mrb[0].mxu0 %v482
      %v729 = vpop.f32.mrb[0].mxu0
      %v730 = vadd.f32 0.0, %v729
      %v731 = vpop.f32.mrb[0].mxu0
      %v732 = vadd.f32 0.0, %v731
      %733 = vmatprep.mubr.f32.mxu0 0.0
      %734 = vmatmul.mubr.f32.gmra.mrb[0].mxu0 %v485
      %v735 = vpop.f32.mrb[0].mxu0
      %v736 = vadd.f32 0.0, %v735
      %v737 = vpop.f32.mrb[0].mxu0
      %v738 = vadd.f32 0.0, %v737
      %739 = vmatprep.mubr.f32.mxu0 0.0
      %740 = vmatmul.mubr.f32.gmra.mrb[0].mxu0 %v488
      %v741 = vpop.f32.mrb[0].mxu0
      %v742 = vadd.f32 0.0, %v741
      %v743 = vpop.f32.mrb[0].mxu0
      %v744 = vadd.f32 0.0, %v743
      %745 = vmatprep.mubr.f32.mxu0 0.0
      %746 = vmatmul.mubr.f32.gmra.mrb[0].mxu0 %v491
      %v747 = vpop.f32.mrb[0].mxu0
      %v748 = vadd.f32 0.0, %v747
      %v749 = vpop.f32.mrb[0].mxu0
      %v750 = vadd.f32 0.0, %v749
      %751 = vmatprep.mubr.f32.mxu0 0.0
      %752 = vmatmul.mubr.f32.gmra.mrb[0].mxu0 %v494
      %v753 = vpop.f32.mrb[0].mxu0
      %v754 = vadd.f32 0.0, %v753
      %v755 = vpop.f32.mrb[0].mxu0
      %v756 = vadd.f32 0.0, %v755
      %757 = vdwg.mxu0
      %v758 = vld [vmem:[#allocation2] sm:$0xff]
      %v759 = vld [vmem:[#allocation2 + $0x8] sm:$0xff]
      %v760 = vld [vmem:[#allocation2 + $0x10] sm:$0xff]
      %v761 = vld [vmem:[#allocation2 + $0x18] sm:$0xff]
      %v762 = vld [vmem:[#allocation2 + $0x20] sm:$0xff]
      %v763 = vld [vmem:[#allocation2 + $0x28] sm:$0xff]
      %v764 = vld [vmem:[#allocation2 + $0x30] sm:$0xff]
      %v765 = vld [vmem:[#allocation2 + $0x38] sm:$0xff]
      %v766 = vld [vmem:[#allocation2 + $0x40] sm:$0xff]
      %v767 = vld [vmem:[#allocation2 + $0x48] sm:$0xff]
      %v768 = vld [vmem:[#allocation2 + $0x50] sm:$0xff]
      %v769 = vld [vmem:[#allocation2 + $0x58] sm:$0xff]
      %v770 = vld [vmem:[#allocation2 + $0x60] sm:$0xff]
      %v771 = vld [vmem:[#allocation2 + $0x68] sm:$0xff]
      %v772 = vld [vmem:[#allocation2 + $0x70] sm:$0xff]
      %v773 = vld [vmem:[#allocation2 + $0x78] sm:$0xff]
      %v774 = vld [vmem:[#allocation2 + $0x80] sm:$0xff]
      %v775 = vld [vmem:[#allocation2 + $0x88] sm:$0xff]
      %v776 = vld [vmem:[#allocation2 + $0x90] sm:$0xff]
      %v777 = vld [vmem:[#allocation2 + $0x98] sm:$0xff]
      %v778 = vld [vmem:[#allocation2 + $0xa0] sm:$0xff]
      %v779 = vld [vmem:[#allocation2 + $0xa8] sm:$0xff]
      %v780 = vld [vmem:[#allocation2 + $0xb0] sm:$0xff]
      %v781 = vld [vmem:[#allocation2 + $0xb8] sm:$0xff]
      %v782 = vld [vmem:[#allocation2 + $0xc0] sm:$0xff]
      %v783 = vld [vmem:[#allocation2 + $0xc8] sm:$0xff]
      %v784 = vld [vmem:[#allocation2 + $0xd0] sm:$0xff]
      %v785 = vld [vmem:[#allocation2 + $0xd8] sm:$0xff]
      %v786 = vld [vmem:[#allocation2 + $0xe0] sm:$0xff]
      %v787 = vld [vmem:[#allocation2 + $0xe8] sm:$0xff]
      %v788 = vld [vmem:[#allocation2 + $0xf0] sm:$0xff]
      %v789 = vld [vmem:[#allocation2 + $0xf8] sm:$0xff]
      %790 = vmatprep.subr.mxu0 0.0
      %791 = vmatpush1.msra.mxu0 1.0
      %792 = vmatprep.subr.mxu0 0.0
      %793 = vmatpush1.msra.mxu0 1.0
      %794 = vmatprep.subr.mxu0 0.0
      %795 = vmatpush1.msra.mxu0 1.0
      %796 = vmatprep.subr.mxu0 0.0
      %797 = vmatpush1.msra.mxu0 1.0
      %798 = vmatprep.subr.mxu0 0.0
      %799 = vmatpush1.msra.mxu0 1.0
      %800 = vmatprep.subr.mxu0 0.0
      %801 = vmatpush1.msra.mxu0 1.0
      %802 = vmatprep.subr.mxu0 0.0
      %803 = vmatpush1.msra.mxu0 1.0
      %804 = vmatprep.subr.mxu0 0.0
      %805 = vmatpush1.msra.mxu0 1.0
      %806 = vmatprep.subr.mxu0 0.0
      %807 = vmatpush1.msra.mxu0 1.0
      %808 = vmatprep.subr.mxu0 0.0
      %809 = vmatpush1.msra.mxu0 1.0
      %810 = vmatprep.subr.mxu0 0.0
      %811 = vmatpush1.msra.mxu0 1.0
      %812 = vmatprep.subr.mxu0 0.0
      %813 = vmatpush1.msra.mxu0 1.0
      %814 = vmatprep.subr.mxu0 0.0
      %815 = vmatpush1.msra.mxu0 1.0
      %816 = vmatprep.subr.mxu0 0.0
      %817 = vmatpush1.msra.mxu0 1.0
      %818 = vmatprep.subr.mxu0 0.0
      %819 = vmatpush1.msra.mxu0 1.0
      %820 = vmatprep.subr.mxu0 0.0
      %821 = vmatpush1.msra.mxu0 1.0
      %822 = vmatprep.subr.mxu0 0.0
      %823 = vmatpush1.msra.mxu0 1.0
      %824 = vmatprep.subr.mxu0 0.0
      %825 = vmatpush1.msra.mxu0 1.0
      %826 = vmatprep.subr.mxu0 0.0
      %827 = vmatpush1.msra.mxu0 1.0
      %828 = vmatprep.subr.mxu0 0.0
      %829 = vmatpush1.msra.mxu0 1.0
      %830 = vmatprep.subr.mxu0 0.0
      %831 = vmatpush1.msra.mxu0 1.0
      %832 = vmatprep.subr.mxu0 0.0
      %833 = vmatpush1.msra.mxu0 1.0
      %834 = vmatprep.subr.mxu0 0.0
      %835 = vmatpush1.msra.mxu0 1.0
      %836 = vmatprep.subr.mxu0 0.0
      %837 = vmatpush1.msra.mxu0 1.0
      %838 = vmatprep.subr.mxu0 0.0
      %839 = vmatpush1.msra.mxu0 1.0
      %840 = vmatprep.subr.mxu0 0.0
      %841 = vmatpush1.msra.mxu0 1.0
      %842 = vmatprep.subr.mxu0 0.0
      %843 = vmatpush1.msra.mxu0 1.0
      %844 = vmatprep.subr.mxu0 0.0
      %845 = vmatpush1.msra.mxu0 1.0
      %846 = vmatprep.subr.mxu0 0.0
      %847 = vmatpush1.msra.mxu0 1.0
      %848 = vmatprep.subr.mxu0 0.0
      %849 = vmatpush1.msra.mxu0 1.0
      %850 = vmatprep.subr.mxu0 0.0
      %851 = vmatpush1.msra.mxu0 1.0
      %852 = vmatprep.subr.mxu0 0.0
      %853 = vmatpush1.msra.mxu0 1.0
      %854 = vmatprep.mubr.f32.mxu0 %v570
      %855 = vmatmul.mubr.f32.gmra.mrb[0].mxu0 %v568
      %v856 = vpop.f32.mrb[0].mxu0
      %v857 = vadd.f32 0.0, %v856
      %v858 = vpop.f32.mrb[0].mxu0
      %859 = vmatprep.mubr.f32.mxu0 %v576
      %860 = vmatmul.mubr.f32.gmra.mrb[0].mxu0 %v574
      %v861 = vpop.f32.mrb[0].mxu0
      %v862 = vadd.f32 0.0, %v861
      %v863 = vpop.f32.mrb[0].mxu0
      %864 = vmatprep.mubr.f32.mxu0 %v582
      %865 = vmatmul.mubr.f32.gmra.mrb[0].mxu0 %v580
      %v866 = vpop.f32.mrb[0].mxu0
      %v867 = vadd.f32 0.0, %v866
      %v868 = vpop.f32.mrb[0].mxu0
      %869 = vmatprep.mubr.f32.mxu0 %v588
      %870 = vmatmul.mubr.f32.gmra.mrb[0].mxu0 %v586
      %v871 = vpop.f32.mrb[0].mxu0
      %v872 = vadd.f32 0.0, %v871
      %v873 = vpop.f32.mrb[0].mxu0
      %874 = vmatprep.mubr.f32.mxu0 %v594
      %875 = vmatmul.mubr.f32.gmra.mrb[0].mxu0 %v592
      %v876 = vpop.f32.mrb[0].mxu0
      %v877 = vadd.f32 0.0, %v876
      %v878 = vpop.f32.mrb[0].mxu0
      %879 = vmatprep.mubr.f32.mxu0 %v600
      %880 = vmatmul.mubr.f32.gmra.mrb[0].mxu0 %v598
      %v881 = vpop.f32.mrb[0].mxu0
      %v882 = vadd.f32 0.0, %v881
      %v883 = vpop.f32.mrb[0].mxu0
      %884 = vmatprep.mubr.f32.mxu0 %v606
      %885 = vmatmul.mubr.f32.gmra.mrb[0].mxu0 %v604
      %v886 = vpop.f32.mrb[0].mxu0
      %v887 = vadd.f32 0.0, %v886
      %v888 = vpop.f32.mrb[0].mxu0
      %889 = vmatprep.mubr.f32.mxu0 %v612
      %890 = vmatmul.mubr.f32.gmra.mrb[0].mxu0 %v610
      %v891 = vpop.f32.mrb[0].mxu0
      %v892 = vadd.f32 0.0, %v891
      %v893 = vpop.f32.mrb[0].mxu0
      %894 = vmatprep.mubr.f32.mxu0 %v618
      %895 = vmatmul.mubr.f32.gmra.mrb[0].mxu0 %v616
      %v896 = vpop.f32.mrb[0].mxu0
      %v897 = vadd.f32 0.0, %v896
      %v898 = vpop.f32.mrb[0].mxu0
      %899 = vmatprep.mubr.f32.mxu0 %v624
      %900 = vmatmul.mubr.f32.gmra.mrb[0].mxu0 %v622
      %v901 = vpop.f32.mrb[0].mxu0
      %v902 = vadd.f32 0.0, %v901
      %v903 = vpop.f32.mrb[0].mxu0
      %904 = vmatprep.mubr.f32.mxu0 %v630
      %905 = vmatmul.mubr.f32.gmra.mrb[0].mxu0 %v628
      %v906 = vpop.f32.mrb[0].mxu0
      %v907 = vadd.f32 0.0, %v906
      %v908 = vpop.f32.mrb[0].mxu0
      %909 = vmatprep.mubr.f32.mxu0 %v636
      %910 = vmatmul.mubr.f32.gmra.mrb[0].mxu0 %v634
      %v911 = vpop.f32.mrb[0].mxu0
      %v912 = vadd.f32 0.0, %v911
      %v913 = vpop.f32.mrb[0].mxu0
      %914 = vmatprep.mubr.f32.mxu0 %v642
      %915 = vmatmul.mubr.f32.gmra.mrb[0].mxu0 %v640
      %v916 = vpop.f32.mrb[0].mxu0
      %v917 = vadd.f32 0.0, %v916
      %v918 = vpop.f32.mrb[0].mxu0
      %919 = vmatprep.mubr.f32.mxu0 %v648
      %920 = vmatmul.mubr.f32.gmra.mrb[0].mxu0 %v646
      %v921 = vpop.f32.mrb[0].mxu0
      %v922 = vadd.f32 0.0, %v921
      %v923 = vpop.f32.mrb[0].mxu0
      %924 = vmatprep.mubr.f32.mxu0 %v654
      %925 = vmatmul.mubr.f32.gmra.mrb[0].mxu0 %v652
      %v926 = vpop.f32.mrb[0].mxu0
      %v927 = vadd.f32 0.0, %v926
      %v928 = vpop.f32.mrb[0].mxu0
      %929 = vmatprep.mubr.f32.mxu0 %v660
      %930 = vmatmul.mubr.f32.gmra.mrb[0].mxu0 %v658
      %v931 = vpop.f32.mrb[0].mxu0
      %v932 = vadd.f32 0.0, %v931
      %v933 = vpop.f32.mrb[0].mxu0
      %934 = vmatprep.mubr.f32.mxu0 %v666
      %935 = vmatmul.mubr.f32.gmra.mrb[0].mxu0 %v664
      %v936 = vpop.f32.mrb[0].mxu0
      %v937 = vadd.f32 0.0, %v936
      %v938 = vpop.f32.mrb[0].mxu0
      %939 = vmatprep.mubr.f32.mxu0 %v672
      %940 = vmatmul.mubr.f32.gmra.mrb[0].mxu0 %v670
      %v941 = vpop.f32.mrb[0].mxu0
      %v942 = vadd.f32 0.0, %v941
      %v943 = vpop.f32.mrb[0].mxu0
      %944 = vmatprep.mubr.f32.mxu0 %v678
      %945 = vmatmul.mubr.f32.gmra.mrb[0].mxu0 %v676
      %v946 = vpop.f32.mrb[0].mxu0
      %v947 = vadd.f32 0.0, %v946
      %v948 = vpop.f32.mrb[0].mxu0
      %949 = vmatprep.mubr.f32.mxu0 %v684
      %950 = vmatmul.mubr.f32.gmra.mrb[0].mxu0 %v682
      %v951 = vpop.f32.mrb[0].mxu0
      %v952 = vadd.f32 0.0, %v951
      %v953 = vpop.f32.mrb[0].mxu0
      %954 = vmatprep.mubr.f32.mxu0 %v690
      %955 = vmatmul.mubr.f32.gmra.mrb[0].mxu0 %v688
      %v956 = vpop.f32.mrb[0].mxu0
      %v957 = vadd.f32 0.0, %v956
      %v958 = vpop.f32.mrb[0].mxu0
      %959 = vmatprep.mubr.f32.mxu0 %v696
      %960 = vmatmul.mubr.f32.gmra.mrb[0].mxu0 %v694
      %v961 = vpop.f32.mrb[0].mxu0
      %v962 = vadd.f32 0.0, %v961
      %v963 = vpop.f32.mrb[0].mxu0
      %964 = vmatprep.mubr.f32.mxu0 %v702
      %965 = vmatmul.mubr.f32.gmra.mrb[0].mxu0 %v700
      %v966 = vpop.f32.mrb[0].mxu0
      %v967 = vadd.f32 0.0, %v966
      %v968 = vpop.f32.mrb[0].mxu0
      %969 = vmatprep.mubr.f32.mxu0 %v708
      %970 = vmatmul.mubr.f32.gmra.mrb[0].mxu0 %v706
      %v971 = vpop.f32.mrb[0].mxu0
      %v972 = vadd.f32 0.0, %v971
      %v973 = vpop.f32.mrb[0].mxu0
      %974 = vmatprep.mubr.f32.mxu0 %v714
      %975 = vmatmul.mubr.f32.gmra.mrb[0].mxu0 %v712
      %v976 = vpop.f32.mrb[0].mxu0
      %v977 = vadd.f32 0.0, %v976
      %v978 = vpop.f32.mrb[0].mxu0
      %979 = vmatprep.mubr.f32.mxu0 %v720
      %980 = vmatmul.mubr.f32.gmra.mrb[0].mxu0 %v718
      %v981 = vpop.f32.mrb[0].mxu0
      %v982 = vadd.f32 0.0, %v981
      %v983 = vpop.f32.mrb[0].mxu0
      %984 = vmatprep.mubr.f32.mxu0 %v726
      %985 = vmatmul.mubr.f32.gmra.mrb[0].mxu0 %v724
      %v986 = vpop.f32.mrb[0].mxu0
      %v987 = vadd.f32 0.0, %v986
      %v988 = vpop.f32.mrb[0].mxu0
      %989 = vmatprep.mubr.f32.mxu0 %v732
      %990 = vmatmul.mubr.f32.gmra.mrb[0].mxu0 %v730
      %v991 = vpop.f32.mrb[0].mxu0
      %v992 = vadd.f32 0.0, %v991
      %v993 = vpop.f32.mrb[0].mxu0
      %994 = vmatprep.mubr.f32.mxu0 %v738
      %995 = vmatmul.mubr.f32.gmra.mrb[0].mxu0 %v736
      %v996 = vpop.f32.mrb[0].mxu0
      %v997 = vadd.f32 0.0, %v996
      %v998 = vpop.f32.mrb[0].mxu0
      %999 = vmatprep.mubr.f32.mxu0 %v744
      %1000 = vmatmul.mubr.f32.gmra.mrb[0].mxu0 %v742
      %v1001 = vpop.f32.mrb[0].mxu0
      %v1002 = vadd.f32 0.0, %v1001
      %v1003 = vpop.f32.mrb[0].mxu0
      %1004 = vmatprep.mubr.f32.mxu0 %v750
      %1005 = vmatmul.mubr.f32.gmra.mrb[0].mxu0 %v748
      %v1006 = vpop.f32.mrb[0].mxu0
      %v1007 = vadd.f32 0.0, %v1006
      %v1008 = vpop.f32.mrb[0].mxu0
      %1009 = vmatprep.mubr.f32.mxu0 %v756
      %1010 = vmatmul.mubr.f32.gmra.mrb[0].mxu0 %v754
      %v1011 = vpop.f32.mrb[0].mxu0
      %v1012 = vadd.f32 0.0, %v1011
      %v1013 = vpop.f32.mrb[0].mxu0
      %1014 = vdwg.mxu0
      %v1015 = vadd.f32 %v758, %v857
      %v1016 = vadd.f32 %v759, %v862
      %v1017 = vadd.f32 %v760, %v867
      %v1018 = vadd.f32 %v761, %v872
      %v1019 = vadd.f32 %v762, %v877
      %v1020 = vadd.f32 %v763, %v882
      %v1021 = vadd.f32 %v764, %v887
      %v1022 = vadd.f32 %v765, %v892
      %v1023 = vadd.f32 %v766, %v897
      %v1024 = vadd.f32 %v767, %v902
      %v1025 = vadd.f32 %v768, %v907
      %v1026 = vadd.f32 %v769, %v912
      %v1027 = vadd.f32 %v770, %v917
      %v1028 = vadd.f32 %v771, %v922
      %v1029 = vadd.f32 %v772, %v927
      %v1030 = vadd.f32 %v773, %v932
      %v1031 = vadd.f32 %v774, %v937
      %v1032 = vadd.f32 %v775, %v942
      %v1033 = vadd.f32 %v776, %v947
      %v1034 = vadd.f32 %v777, %v952
      %v1035 = vadd.f32 %v778, %v957
      %v1036 = vadd.f32 %v779, %v962
      %v1037 = vadd.f32 %v780, %v967
      %v1038 = vadd.f32 %v781, %v972
      %v1039 = vadd.f32 %v782, %v977
      %v1040 = vadd.f32 %v783, %v982
      %v1041 = vadd.f32 %v784, %v987
      %v1042 = vadd.f32 %v785, %v992
      %v1043 = vadd.f32 %v786, %v997
      %v1044 = vadd.f32 %v787, %v1002
      %v1045 = vadd.f32 %v788, %v1007
      %v1046 = vadd.f32 %v789, %v1012
      %vm1047 = vcmask 7168
      %1048 = vst.msk [vmem:[#allocation2] sm:$0xff] %vm1047, %v1015
      %1049 = vst.msk [vmem:[#allocation2 + $0x8] sm:$0xff] %vm1047, %v1016
      %1050 = vst.msk [vmem:[#allocation2 + $0x10] sm:$0xff] %vm1047, %v1017
      %1051 = vst.msk [vmem:[#allocation2 + $0x18] sm:$0xff] %vm1047, %v1018
      %1052 = vst.msk [vmem:[#allocation2 + $0x20] sm:$0xff] %vm1047, %v1019
      %1053 = vst.msk [vmem:[#allocation2 + $0x28] sm:$0xff] %vm1047, %v1020
      %1054 = vst.msk [vmem:[#allocation2 + $0x30] sm:$0xff] %vm1047, %v1021
      %1055 = vst.msk [vmem:[#allocation2 + $0x38] sm:$0xff] %vm1047, %v1022
      %1056 = vst.msk [vmem:[#allocation2 + $0x40] sm:$0xff] %vm1047, %v1023
      %1057 = vst.msk [vmem:[#allocation2 + $0x48] sm:$0xff] %vm1047, %v1024
      %1058 = vst.msk [vmem:[#allocation2 + $0x50] sm:$0xff] %vm1047, %v1025
      %1059 = vst.msk [vmem:[#allocation2 + $0x58] sm:$0xff] %vm1047, %v1026
      %1060 = vst.msk [vmem:[#allocation2 + $0x60] sm:$0xff] %vm1047, %v1027
      %1061 = vst.msk [vmem:[#allocation2 + $0x68] sm:$0xff] %vm1047, %v1028
      %1062 = vst.msk [vmem:[#allocation2 + $0x70] sm:$0xff] %vm1047, %v1029
      %1063 = vst.msk [vmem:[#allocation2 + $0x78] sm:$0xff] %vm1047, %v1030
      %1064 = vst.msk [vmem:[#allocation2 + $0x80] sm:$0xff] %vm1047, %v1031
      %1065 = vst.msk [vmem:[#allocation2 + $0x88] sm:$0xff] %vm1047, %v1032
      %1066 = vst.msk [vmem:[#allocation2 + $0x90] sm:$0xff] %vm1047, %v1033
      %1067 = vst.msk [vmem:[#allocation2 + $0x98] sm:$0xff] %vm1047, %v1034
      %1068 = vst.msk [vmem:[#allocation2 + $0xa0] sm:$0xff] %vm1047, %v1035
      %1069 = vst.msk [vmem:[#allocation2 + $0xa8] sm:$0xff] %vm1047, %v1036
      %1070 = vst.msk [vmem:[#allocation2 + $0xb0] sm:$0xff] %vm1047, %v1037
      %1071 = vst.msk [vmem:[#allocation2 + $0xb8] sm:$0xff] %vm1047, %v1038
      %1072 = vst.msk [vmem:[#allocation2 + $0xc0] sm:$0xff] %vm1047, %v1039
      %1073 = vst.msk [vmem:[#allocation2 + $0xc8] sm:$0xff] %vm1047, %v1040
      %1074 = vst.msk [vmem:[#allocation2 + $0xd0] sm:$0xff] %vm1047, %v1041
      %1075 = vst.msk [vmem:[#allocation2 + $0xd8] sm:$0xff] %vm1047, %v1042
      %1076 = vst.msk [vmem:[#allocation2 + $0xe0] sm:$0xff] %vm1047, %v1043
      %1077 = vst.msk [vmem:[#allocation2 + $0xe8] sm:$0xff] %vm1047, %v1044
      %1078 = vst.msk [vmem:[#allocation2 + $0xf0] sm:$0xff] %vm1047, %v1045
      %1079 = vst.msk [vmem:[#allocation2 + $0xf8] sm:$0xff] %vm1047, %v1046
      %v1080 = vld [vmem:[#allocation3] sm:$0xff]
      %v1081 = vld [vmem:[#allocation3 + $0x8] sm:$0xff]
      %v1082 = vld [vmem:[#allocation3 + $0x10] sm:$0xff]
      %v1083 = vld [vmem:[#allocation3 + $0x18] sm:$0xff]
      %v1084 = vld [vmem:[#allocation3 + $0x20] sm:$0xff]
      %v1085 = vld [vmem:[#allocation3 + $0x28] sm:$0xff]
      %v1086 = vld [vmem:[#allocation3 + $0x30] sm:$0xff]
      %v1087 = vld [vmem:[#allocation3 + $0x38] sm:$0xff]
      %v1088 = vld [vmem:[#allocation3 + $0x40] sm:$0xff]
      %v1089 = vld [vmem:[#allocation3 + $0x48] sm:$0xff]
      %v1090 = vld [vmem:[#allocation3 + $0x50] sm:$0xff]
      %v1091 = vld [vmem:[#allocation3 + $0x58] sm:$0xff]
      %v1092 = vld [vmem:[#allocation3 + $0x60] sm:$0xff]
      %v1093 = vld [vmem:[#allocation3 + $0x68] sm:$0xff]
      %v1094 = vld [vmem:[#allocation3 + $0x70] sm:$0xff]
      %v1095 = vld [vmem:[#allocation3 + $0x78] sm:$0xff]
      %v1096 = vld [vmem:[#allocation3 + $0x80] sm:$0xff]
      %v1097 = vld [vmem:[#allocation3 + $0x88] sm:$0xff]
      %v1098 = vld [vmem:[#allocation3 + $0x90] sm:$0xff]
      %v1099 = vld [vmem:[#allocation3 + $0x98] sm:$0xff]
      %v1100 = vld [vmem:[#allocation3 + $0xa0] sm:$0xff]
      %v1101 = vld [vmem:[#allocation3 + $0xa8] sm:$0xff]
      %v1102 = vld [vmem:[#allocation3 + $0xb0] sm:$0xff]
      %v1103 = vld [vmem:[#allocation3 + $0xb8] sm:$0xff]
      %v1104 = vld [vmem:[#allocation3 + $0xc0] sm:$0xff]
      %v1105 = vld [vmem:[#allocation3 + $0xc8] sm:$0xff]
      %v1106 = vld [vmem:[#allocation3 + $0xd0] sm:$0xff]
      %v1107 = vld [vmem:[#allocation3 + $0xd8] sm:$0xff]
      %v1108 = vld [vmem:[#allocation3 + $0xe0] sm:$0xff]
      %v1109 = vld [vmem:[#allocation3 + $0xe8] sm:$0xff]
      %v1110 = vld [vmem:[#allocation3 + $0xf0] sm:$0xff]
      %v1111 = vld [vmem:[#allocation3 + $0xf8] sm:$0xff]
      %v1112 = vmul.f32 %v568, %v568
      %v1113 = vmul.f32 %v570, %v570
      %v1114 = vmul.f32 %v574, %v574
      %v1115 = vmul.f32 %v576, %v576
      %v1116 = vmul.f32 %v580, %v580
      %v1117 = vmul.f32 %v582, %v582
      %v1118 = vmul.f32 %v586, %v586
      %v1119 = vmul.f32 %v588, %v588
      %v1120 = vmul.f32 %v592, %v592
      %v1121 = vmul.f32 %v594, %v594
      %v1122 = vmul.f32 %v598, %v598
      %v1123 = vmul.f32 %v600, %v600
      %v1124 = vmul.f32 %v604, %v604
      %v1125 = vmul.f32 %v606, %v606
      %v1126 = vmul.f32 %v610, %v610
      %v1127 = vmul.f32 %v612, %v612
      %v1128 = vmul.f32 %v616, %v616
      %v1129 = vmul.f32 %v618, %v618
      %v1130 = vmul.f32 %v622, %v622
      %v1131 = vmul.f32 %v624, %v624
      %v1132 = vmul.f32 %v628, %v628
      %v1133 = vmul.f32 %v630, %v630
      %v1134 = vmul.f32 %v634, %v634
      %v1135 = vmul.f32 %v636, %v636
      %v1136 = vmul.f32 %v640, %v640
      %v1137 = vmul.f32 %v642, %v642
      %v1138 = vmul.f32 %v646, %v646
      %v1139 = vmul.f32 %v648, %v648
      %v1140 = vmul.f32 %v652, %v652
      %v1141 = vmul.f32 %v654, %v654
      %v1142 = vmul.f32 %v658, %v658
      %v1143 = vmul.f32 %v660, %v660
      %v1144 = vmul.f32 %v664, %v664
      %v1145 = vmul.f32 %v666, %v666
      %v1146 = vmul.f32 %v670, %v670
      %v1147 = vmul.f32 %v672, %v672
      %v1148 = vmul.f32 %v676, %v676
      %v1149 = vmul.f32 %v678, %v678
      %v1150 = vmul.f32 %v682, %v682
      %v1151 = vmul.f32 %v684, %v684
      %v1152 = vmul.f32 %v688, %v688
      %v1153 = vmul.f32 %v690, %v690
      %v1154 = vmul.f32 %v694, %v694
      %v1155 = vmul.f32 %v696, %v696
      %v1156 = vmul.f32 %v700, %v700
      %v1157 = vmul.f32 %v702, %v702
      %v1158 = vmul.f32 %v706, %v706
      %v1159 = vmul.f32 %v708, %v708
      %v1160 = vmul.f32 %v712, %v712
      %v1161 = vmul.f32 %v714, %v714
      %v1162 = vmul.f32 %v718, %v718
      %v1163 = vmul.f32 %v720, %v720
      %v1164 = vmul.f32 %v724, %v724
      %v1165 = vmul.f32 %v726, %v726
      %v1166 = vmul.f32 %v730, %v730
      %v1167 = vmul.f32 %v732, %v732
      %v1168 = vmul.f32 %v736, %v736
      %v1169 = vmul.f32 %v738, %v738
      %v1170 = vmul.f32 %v742, %v742
      %v1171 = vmul.f32 %v744, %v744
      %v1172 = vmul.f32 %v748, %v748
      %v1173 = vmul.f32 %v750, %v750
      %v1174 = vmul.f32 %v754, %v754
      %v1175 = vmul.f32 %v756, %v756
      %1176 = vmatprep.subr.mxu0 0.0
      %1177 = vmatpush1.msra.mxu0 1.0
      %1178 = vmatprep.subr.mxu0 0.0
      %1179 = vmatpush1.msra.mxu0 1.0
      %1180 = vmatprep.subr.mxu0 0.0
      %1181 = vmatpush1.msra.mxu0 1.0
      %1182 = vmatprep.subr.mxu0 0.0
      %1183 = vmatpush1.msra.mxu0 1.0
      %1184 = vmatprep.subr.mxu0 0.0
      %1185 = vmatpush1.msra.mxu0 1.0
      %1186 = vmatprep.subr.mxu0 0.0
      %1187 = vmatpush1.msra.mxu0 1.0
      %1188 = vmatprep.subr.mxu0 0.0
      %1189 = vmatpush1.msra.mxu0 1.0
      %1190 = vmatprep.subr.mxu0 0.0
      %1191 = vmatpush1.msra.mxu0 1.0
      %1192 = vmatprep.subr.mxu0 0.0
      %1193 = vmatpush1.msra.mxu0 1.0
      %1194 = vmatprep.subr.mxu0 0.0
      %1195 = vmatpush1.msra.mxu0 1.0
      %1196 = vmatprep.subr.mxu0 0.0
      %1197 = vmatpush1.msra.mxu0 1.0
      %1198 = vmatprep.subr.mxu0 0.0
      %1199 = vmatpush1.msra.mxu0 1.0
      %1200 = vmatprep.subr.mxu0 0.0
      %1201 = vmatpush1.msra.mxu0 1.0
      %1202 = vmatprep.subr.mxu0 0.0
      %1203 = vmatpush1.msra.mxu0 1.0
      %1204 = vmatprep.subr.mxu0 0.0
      %1205 = vmatpush1.msra.mxu0 1.0
      %1206 = vmatprep.subr.mxu0 0.0
      %1207 = vmatpush1.msra.mxu0 1.0
      %1208 = vmatprep.subr.mxu0 0.0
      %1209 = vmatpush1.msra.mxu0 1.0
      %1210 = vmatprep.subr.mxu0 0.0
      %1211 = vmatpush1.msra.mxu0 1.0
      %1212 = vmatprep.subr.mxu0 0.0
      %1213 = vmatpush1.msra.mxu0 1.0
      %1214 = vmatprep.subr.mxu0 0.0
      %1215 = vmatpush1.msra.mxu0 1.0
      %1216 = vmatprep.subr.mxu0 0.0
      %1217 = vmatpush1.msra.mxu0 1.0
      %1218 = vmatprep.subr.mxu0 0.0
      %1219 = vmatpush1.msra.mxu0 1.0
      %1220 = vmatprep.subr.mxu0 0.0
      %1221 = vmatpush1.msra.mxu0 1.0
      %1222 = vmatprep.subr.mxu0 0.0
      %1223 = vmatpush1.msra.mxu0 1.0
      %1224 = vmatprep.subr.mxu0 0.0
      %1225 = vmatpush1.msra.mxu0 1.0
      %1226 = vmatprep.subr.mxu0 0.0
      %1227 = vmatpush1.msra.mxu0 1.0
      %1228 = vmatprep.subr.mxu0 0.0
      %1229 = vmatpush1.msra.mxu0 1.0
      %1230 = vmatprep.subr.mxu0 0.0
      %1231 = vmatpush1.msra.mxu0 1.0
      %1232 = vmatprep.subr.mxu0 0.0
      %1233 = vmatpush1.msra.mxu0 1.0
      %1234 = vmatprep.subr.mxu0 0.0
      %1235 = vmatpush1.msra.mxu0 1.0
      %1236 = vmatprep.subr.mxu0 0.0
      %1237 = vmatpush1.msra.mxu0 1.0
      %1238 = vmatprep.subr.mxu0 0.0
      %1239 = vmatpush1.msra.mxu0 1.0
      %1240 = vmatprep.mubr.f32.mxu0 %v1113
      %1241 = vmatmul.mubr.f32.gmra.mrb[0].mxu0 %v1112
      %v1242 = vpop.f32.mrb[0].mxu0
      %v1243 = vadd.f32 0.0, %v1242
      %v1244 = vpop.f32.mrb[0].mxu0
      %1245 = vmatprep.mubr.f32.mxu0 %v1115
      %1246 = vmatmul.mubr.f32.gmra.mrb[0].mxu0 %v1114
      %v1247 = vpop.f32.mrb[0].mxu0
      %v1248 = vadd.f32 0.0, %v1247
      %v1249 = vpop.f32.mrb[0].mxu0
      %1250 = vmatprep.mubr.f32.mxu0 %v1117
      %1251 = vmatmul.mubr.f32.gmra.mrb[0].mxu0 %v1116
      %v1252 = vpop.f32.mrb[0].mxu0
      %v1253 = vadd.f32 0.0, %v1252
      %v1254 = vpop.f32.mrb[0].mxu0
      %1255 = vmatprep.mubr.f32.mxu0 %v1119
      %1256 = vmatmul.mubr.f32.gmra.mrb[0].mxu0 %v1118
      %v1257 = vpop.f32.mrb[0].mxu0
      %v1258 = vadd.f32 0.0, %v1257
      %v1259 = vpop.f32.mrb[0].mxu0
      %1260 = vmatprep.mubr.f32.mxu0 %v1121
      %1261 = vmatmul.mubr.f32.gmra.mrb[0].mxu0 %v1120
      %v1262 = vpop.f32.mrb[0].mxu0
      %v1263 = vadd.f32 0.0, %v1262
      %v1264 = vpop.f32.mrb[0].mxu0
      %1265 = vmatprep.mubr.f32.mxu0 %v1123
      %1266 = vmatmul.mubr.f32.gmra.mrb[0].mxu0 %v1122
      %v1267 = vpop.f32.mrb[0].mxu0
      %v1268 = vadd.f32 0.0, %v1267
      %v1269 = vpop.f32.mrb[0].mxu0
      %1270 = vmatprep.mubr.f32.mxu0 %v1125
      %1271 = vmatmul.mubr.f32.gmra.mrb[0].mxu0 %v1124
      %v1272 = vpop.f32.mrb[0].mxu0
      %v1273 = vadd.f32 0.0, %v1272
      %v1274 = vpop.f32.mrb[0].mxu0
      %1275 = vmatprep.mubr.f32.mxu0 %v1127
      %1276 = vmatmul.mubr.f32.gmra.mrb[0].mxu0 %v1126
      %v1277 = vpop.f32.mrb[0].mxu0
      %v1278 = vadd.f32 0.0, %v1277
      %v1279 = vpop.f32.mrb[0].mxu0
      %1280 = vmatprep.mubr.f32.mxu0 %v1129
      %1281 = vmatmul.mubr.f32.gmra.mrb[0].mxu0 %v1128
      %v1282 = vpop.f32.mrb[0].mxu0
      %v1283 = vadd.f32 0.0, %v1282
      %v1284 = vpop.f32.mrb[0].mxu0
      %1285 = vmatprep.mubr.f32.mxu0 %v1131
      %1286 = vmatmul.mubr.f32.gmra.mrb[0].mxu0 %v1130
      %v1287 = vpop.f32.mrb[0].mxu0
      %v1288 = vadd.f32 0.0, %v1287
      %v1289 = vpop.f32.mrb[0].mxu0
      %1290 = vmatprep.mubr.f32.mxu0 %v1133
      %1291 = vmatmul.mubr.f32.gmra.mrb[0].mxu0 %v1132
      %v1292 = vpop.f32.mrb[0].mxu0
      %v1293 = vadd.f32 0.0, %v1292
      %v1294 = vpop.f32.mrb[0].mxu0
      %1295 = vmatprep.mubr.f32.mxu0 %v1135
      %1296 = vmatmul.mubr.f32.gmra.mrb[0].mxu0 %v1134
      %v1297 = vpop.f32.mrb[0].mxu0
      %v1298 = vadd.f32 0.0, %v1297
      %v1299 = vpop.f32.mrb[0].mxu0
      %1300 = vmatprep.mubr.f32.mxu0 %v1137
      %1301 = vmatmul.mubr.f32.gmra.mrb[0].mxu0 %v1136
      %v1302 = vpop.f32.mrb[0].mxu0
      %v1303 = vadd.f32 0.0, %v1302
      %v1304 = vpop.f32.mrb[0].mxu0
      %1305 = vmatprep.mubr.f32.mxu0 %v1139
      %1306 = vmatmul.mubr.f32.gmra.mrb[0].mxu0 %v1138
      %v1307 = vpop.f32.mrb[0].mxu0
      %v1308 = vadd.f32 0.0, %v1307
      %v1309 = vpop.f32.mrb[0].mxu0
      %1310 = vmatprep.mubr.f32.mxu0 %v1141
      %1311 = vmatmul.mubr.f32.gmra.mrb[0].mxu0 %v1140
      %v1312 = vpop.f32.mrb[0].mxu0
      %v1313 = vadd.f32 0.0, %v1312
      %v1314 = vpop.f32.mrb[0].mxu0
      %1315 = vmatprep.mubr.f32.mxu0 %v1143
      %1316 = vmatmul.mubr.f32.gmra.mrb[0].mxu0 %v1142
      %v1317 = vpop.f32.mrb[0].mxu0
      %v1318 = vadd.f32 0.0, %v1317
      %v1319 = vpop.f32.mrb[0].mxu0
      %1320 = vmatprep.mubr.f32.mxu0 %v1145
      %1321 = vmatmul.mubr.f32.gmra.mrb[0].mxu0 %v1144
      %v1322 = vpop.f32.mrb[0].mxu0
      %v1323 = vadd.f32 0.0, %v1322
      %v1324 = vpop.f32.mrb[0].mxu0
      %1325 = vmatprep.mubr.f32.mxu0 %v1147
      %1326 = vmatmul.mubr.f32.gmra.mrb[0].mxu0 %v1146
      %v1327 = vpop.f32.mrb[0].mxu0
      %v1328 = vadd.f32 0.0, %v1327
      %v1329 = vpop.f32.mrb[0].mxu0
      %1330 = vmatprep.mubr.f32.mxu0 %v1149
      %1331 = vmatmul.mubr.f32.gmra.mrb[0].mxu0 %v1148
      %v1332 = vpop.f32.mrb[0].mxu0
      %v1333 = vadd.f32 0.0, %v1332
      %v1334 = vpop.f32.mrb[0].mxu0
      %1335 = vmatprep.mubr.f32.mxu0 %v1151
      %1336 = vmatmul.mubr.f32.gmra.mrb[0].mxu0 %v1150
      %v1337 = vpop.f32.mrb[0].mxu0
      %v1338 = vadd.f32 0.0, %v1337
      %v1339 = vpop.f32.mrb[0].mxu0
      %1340 = vmatprep.mubr.f32.mxu0 %v1153
      %1341 = vmatmul.mubr.f32.gmra.mrb[0].mxu0 %v1152
      %v1342 = vpop.f32.mrb[0].mxu0
      %v1343 = vadd.f32 0.0, %v1342
      %v1344 = vpop.f32.mrb[0].mxu0
      %1345 = vmatprep.mubr.f32.mxu0 %v1155
      %1346 = vmatmul.mubr.f32.gmra.mrb[0].mxu0 %v1154
      %v1347 = vpop.f32.mrb[0].mxu0
      %v1348 = vadd.f32 0.0, %v1347
      %v1349 = vpop.f32.mrb[0].mxu0
      %1350 = vmatprep.mubr.f32.mxu0 %v1157
      %1351 = vmatmul.mubr.f32.gmra.mrb[0].mxu0 %v1156
      %v1352 = vpop.f32.mrb[0].mxu0
      %v1353 = vadd.f32 0.0, %v1352
      %v1354 = vpop.f32.mrb[0].mxu0
      %1355 = vmatprep.mubr.f32.mxu0 %v1159
      %1356 = vmatmul.mubr.f32.gmra.mrb[0].mxu0 %v1158
      %v1357 = vpop.f32.mrb[0].mxu0
      %v1358 = vadd.f32 0.0, %v1357
      %v1359 = vpop.f32.mrb[0].mxu0
      %1360 = vmatprep.mubr.f32.mxu0 %v1161
      %1361 = vmatmul.mubr.f32.gmra.mrb[0].mxu0 %v1160
      %v1362 = vpop.f32.mrb[0].mxu0
      %v1363 = vadd.f32 0.0, %v1362
      %v1364 = vpop.f32.mrb[0].mxu0
      %1365 = vmatprep.mubr.f32.mxu0 %v1163
      %1366 = vmatmul.mubr.f32.gmra.mrb[0].mxu0 %v1162
      %v1367 = vpop.f32.mrb[0].mxu0
      %v1368 = vadd.f32 0.0, %v1367
      %v1369 = vpop.f32.mrb[0].mxu0
      %1370 = vmatprep.mubr.f32.mxu0 %v1165
      %1371 = vmatmul.mubr.f32.gmra.mrb[0].mxu0 %v1164
      %v1372 = vpop.f32.mrb[0].mxu0
      %v1373 = vadd.f32 0.0, %v1372
      %v1374 = vpop.f32.mrb[0].mxu0
      %1375 = vmatprep.mubr.f32.mxu0 %v1167
      %1376 = vmatmul.mubr.f32.gmra.mrb[0].mxu0 %v1166
      %v1377 = vpop.f32.mrb[0].mxu0
      %v1378 = vadd.f32 0.0, %v1377
      %v1379 = vpop.f32.mrb[0].mxu0
      %1380 = vmatprep.mubr.f32.mxu0 %v1169
      %1381 = vmatmul.mubr.f32.gmra.mrb[0].mxu0 %v1168
      %v1382 = vpop.f32.mrb[0].mxu0
      %v1383 = vadd.f32 0.0, %v1382
      %v1384 = vpop.f32.mrb[0].mxu0
      %1385 = vmatprep.mubr.f32.mxu0 %v1171
      %1386 = vmatmul.mubr.f32.gmra.mrb[0].mxu0 %v1170
      %v1387 = vpop.f32.mrb[0].mxu0
      %v1388 = vadd.f32 0.0, %v1387
      %v1389 = vpop.f32.mrb[0].mxu0
      %1390 = vmatprep.mubr.f32.mxu0 %v1173
      %1391 = vmatmul.mubr.f32.gmra.mrb[0].mxu0 %v1172
      %v1392 = vpop.f32.mrb[0].mxu0
      %v1393 = vadd.f32 0.0, %v1392
      %v1394 = vpop.f32.mrb[0].mxu0
      %1395 = vmatprep.mubr.f32.mxu0 %v1175
      %1396 = vmatmul.mubr.f32.gmra.mrb[0].mxu0 %v1174
      %v1397 = vpop.f32.mrb[0].mxu0
      %v1398 = vadd.f32 0.0, %v1397
      %v1399 = vpop.f32.mrb[0].mxu0
      %1400 = vdwg.mxu0
      %v1401 = vadd.f32 %v1080, %v1243
      %v1402 = vadd.f32 %v1081, %v1248
      %v1403 = vadd.f32 %v1082, %v1253
      %v1404 = vadd.f32 %v1083, %v1258
      %v1405 = vadd.f32 %v1084, %v1263
      %v1406 = vadd.f32 %v1085, %v1268
      %v1407 = vadd.f32 %v1086, %v1273
      %v1408 = vadd.f32 %v1087, %v1278
      %v1409 = vadd.f32 %v1088, %v1283
      %v1410 = vadd.f32 %v1089, %v1288
      %v1411 = vadd.f32 %v1090, %v1293
      %v1412 = vadd.f32 %v1091, %v1298
      %v1413 = vadd.f32 %v1092, %v1303
      %v1414 = vadd.f32 %v1093, %v1308
      %v1415 = vadd.f32 %v1094, %v1313
      %v1416 = vadd.f32 %v1095, %v1318
      %v1417 = vadd.f32 %v1096, %v1323
      %v1418 = vadd.f32 %v1097, %v1328
      %v1419 = vadd.f32 %v1098, %v1333
      %v1420 = vadd.f32 %v1099, %v1338
      %v1421 = vadd.f32 %v1100, %v1343
      %v1422 = vadd.f32 %v1101, %v1348
      %v1423 = vadd.f32 %v1102, %v1353
      %v1424 = vadd.f32 %v1103, %v1358
      %v1425 = vadd.f32 %v1104, %v1363
      %v1426 = vadd.f32 %v1105, %v1368
      %v1427 = vadd.f32 %v1106, %v1373
      %v1428 = vadd.f32 %v1107, %v1378
      %v1429 = vadd.f32 %v1108, %v1383
      %v1430 = vadd.f32 %v1109, %v1388
      %v1431 = vadd.f32 %v1110, %v1393
      %v1432 = vadd.f32 %v1111, %v1398
      %1433 = vst.msk [vmem:[#allocation3] sm:$0xff] %vm1047, %v1401
      %1434 = vst.msk [vmem:[#allocation3 + $0x8] sm:$0xff] %vm1047, %v1402
      %1435 = vst.msk [vmem:[#allocation3 + $0x10] sm:$0xff] %vm1047, %v1403
      %1436 = vst.msk [vmem:[#allocation3 + $0x18] sm:$0xff] %vm1047, %v1404
      %1437 = vst.msk [vmem:[#allocation3 + $0x20] sm:$0xff] %vm1047, %v1405
      %1438 = vst.msk [vmem:[#allocation3 + $0x28] sm:$0xff] %vm1047, %v1406
      %1439 = vst.msk [vmem:[#allocation3 + $0x30] sm:$0xff] %vm1047, %v1407
      %1440 = vst.msk [vmem:[#allocation3 + $0x38] sm:$0xff] %vm1047, %v1408
      %1441 = vst.msk [vmem:[#allocation3 + $0x40] sm:$0xff] %vm1047, %v1409
      %1442 = vst.msk [vmem:[#allocation3 + $0x48] sm:$0xff] %vm1047, %v1410
      %1443 = vst.msk [vmem:[#allocation3 + $0x50] sm:$0xff] %vm1047, %v1411
      %1444 = vst.msk [vmem:[#allocation3 + $0x58] sm:$0xff] %vm1047, %v1412
      %1445 = vst.msk [vmem:[#allocation3 + $0x60] sm:$0xff] %vm1047, %v1413
      %1446 = vst.msk [vmem:[#allocation3 + $0x68] sm:$0xff] %vm1047, %v1414
      %1447 = vst.msk [vmem:[#allocation3 + $0x70] sm:$0xff] %vm1047, %v1415
      %1448 = vst.msk [vmem:[#allocation3 + $0x78] sm:$0xff] %vm1047, %v1416
      %1449 = vst.msk [vmem:[#allocation3 + $0x80] sm:$0xff] %vm1047, %v1417
      %1450 = vst.msk [vmem:[#allocation3 + $0x88] sm:$0xff] %vm1047, %v1418
      %1451 = vst.msk [vmem:[#allocation3 + $0x90] sm:$0xff] %vm1047, %v1419
      %1452 = vst.msk [vmem:[#allocation3 + $0x98] sm:$0xff] %vm1047, %v1420
      %1453 = vst.msk [vmem:[#allocation3 + $0xa0] sm:$0xff] %vm1047, %v1421
      %1454 = vst.msk [vmem:[#allocation3 + $0xa8] sm:$0xff] %vm1047, %v1422
      %1455 = vst.msk [vmem:[#allocation3 + $0xb0] sm:$0xff] %vm1047, %v1423
      %1456 = vst.msk [vmem:[#allocation3 + $0xb8] sm:$0xff] %vm1047, %v1424
      %1457 = vst.msk [vmem:[#allocation3 + $0xc0] sm:$0xff] %vm1047, %v1425
      %1458 = vst.msk [vmem:[#allocation3 + $0xc8] sm:$0xff] %vm1047, %v1426
      %1459 = vst.msk [vmem:[#allocation3 + $0xd0] sm:$0xff] %vm1047, %v1427
      %1460 = vst.msk [vmem:[#allocation3 + $0xd8] sm:$0xff] %vm1047, %v1428
      %1461 = vst.msk [vmem:[#allocation3 + $0xe0] sm:$0xff] %vm1047, %v1429
      %1462 = vst.msk [vmem:[#allocation3 + $0xe8] sm:$0xff] %vm1047, %v1430
      %1463 = vst.msk [vmem:[#allocation3 + $0xf0] sm:$0xff] %vm1047, %v1431
      %1464 = vst.msk [vmem:[#allocation3 + $0xf8] sm:$0xff] %vm1047, %v1432
      // Predicated region
      $region49: #{tpu_custom_call.1} parent=43 // pred_check
        _
      $region50: #{tpu_custom_call.1} parent=43 // pred_check_branch
        %1466 = sbr.rel (%p295) target = $region52
      $region51: #{tpu_custom_call.1} parent=43 // pred_region
        %v1467 = vld [vmem:[%s2] sm:$0xff]
        %v1468 = vld [vmem:[#allocation2] sm:$0xff]
        %v1469 = vld [vmem:[#allocation2 + $0x8] sm:$0xff]
        %v1470 = vld [vmem:[#allocation2 + $0x10] sm:$0xff]
        %v1471 = vld [vmem:[#allocation2 + $0x18] sm:$0xff]
        %v1472 = vld [vmem:[#allocation2 + $0x20] sm:$0xff]
        %v1473 = vld [vmem:[#allocation2 + $0x28] sm:$0xff]
        %v1474 = vld [vmem:[#allocation2 + $0x30] sm:$0xff]
        %v1475 = vld [vmem:[#allocation2 + $0x38] sm:$0xff]
        %v1476 = vld [vmem:[#allocation2 + $0x40] sm:$0xff]
        %v1477 = vld [vmem:[#allocation2 + $0x48] sm:$0xff]
        %v1478 = vld [vmem:[#allocation2 + $0x50] sm:$0xff]
        %v1479 = vld [vmem:[#allocation2 + $0x58] sm:$0xff]
        %v1480 = vld [vmem:[#allocation2 + $0x60] sm:$0xff]
        %v1481 = vld [vmem:[#allocation2 + $0x68] sm:$0xff]
        %v1482 = vld [vmem:[#allocation2 + $0x70] sm:$0xff]
        %v1483 = vld [vmem:[#allocation2 + $0x78] sm:$0xff]
        %v1484 = vld [vmem:[#allocation2 + $0x80] sm:$0xff]
        %v1485 = vld [vmem:[#allocation2 + $0x88] sm:$0xff]
        %v1486 = vld [vmem:[#allocation2 + $0x90] sm:$0xff]
        %v1487 = vld [vmem:[#allocation2 + $0x98] sm:$0xff]
        %v1488 = vld [vmem:[#allocation2 + $0xa0] sm:$0xff]
        %v1489 = vld [vmem:[#allocation2 + $0xa8] sm:$0xff]
        %v1490 = vld [vmem:[#allocation2 + $0xb0] sm:$0xff]
        %v1491 = vld [vmem:[#allocation2 + $0xb8] sm:$0xff]
        %v1492 = vld [vmem:[#allocation2 + $0xc0] sm:$0xff]
        %v1493 = vld [vmem:[#allocation2 + $0xc8] sm:$0xff]
        %v1494 = vld [vmem:[#allocation2 + $0xd0] sm:$0xff]
        %v1495 = vld [vmem:[#allocation2 + $0xd8] sm:$0xff]
        %v1496 = vld [vmem:[#allocation2 + $0xe0] sm:$0xff]
        %v1497 = vld [vmem:[#allocation2 + $0xe8] sm:$0xff]
        %v1498 = vld [vmem:[#allocation2 + $0xf0] sm:$0xff]
        %v1499 = vld [vmem:[#allocation2 + $0xf8] sm:$0xff]
        %v1501 = vcombine.high %v1467, %v1467
        %1503 = vmatprep.subr.mxu0 0.0
        %1504 = vmatpush1.msra.mxu0 %v1468
        %1505 = vmatprep.subr.mxu0 0.0
        %1506 = vmatpush1.msra.mxu0 %v1469
        %1507 = vmatprep.subr.mxu0 0.0
        %1508 = vmatpush1.msra.mxu0 %v1470
        %1509 = vmatprep.subr.mxu0 0.0
        %1510 = vmatpush1.msra.mxu0 %v1471
        %1511 = vmatprep.subr.mxu0 0.0
        %1512 = vmatpush1.msra.mxu0 %v1472
        %1513 = vmatprep.subr.mxu0 0.0
        %1514 = vmatpush1.msra.mxu0 %v1473
        %1515 = vmatprep.subr.mxu0 0.0
        %1516 = vmatpush1.msra.mxu0 %v1474
        %1517 = vmatprep.subr.mxu0 0.0
        %1518 = vmatpush1.msra.mxu0 %v1475
        %1519 = vmatprep.subr.mxu0 0.0
        %1520 = vmatpush1.msra.mxu0 %v1476
        %1521 = vmatprep.subr.mxu0 0.0
        %1522 = vmatpush1.msra.mxu0 %v1477
        %1523 = vmatprep.subr.mxu0 0.0
        %1524 = vmatpush1.msra.mxu0 %v1478
        %1525 = vmatprep.subr.mxu0 0.0
        %1526 = vmatpush1.msra.mxu0 %v1479
        %1527 = vmatprep.subr.mxu0 0.0
        %1528 = vmatpush1.msra.mxu0 %v1480
        %1529 = vmatprep.subr.mxu0 0.0
        %1530 = vmatpush1.msra.mxu0 %v1481
        %1531 = vmatprep.subr.mxu0 0.0
        %1532 = vmatpush1.msra.mxu0 %v1482
        %1533 = vmatprep.subr.mxu0 0.0
        %1534 = vmatpush1.msra.mxu0 %v1483
        %1535 = vmatprep.subr.mxu0 0.0
        %1536 = vmatpush1.msra.mxu0 %v1484
        %1537 = vmatprep.subr.mxu0 0.0
        %1538 = vmatpush1.msra.mxu0 %v1485
        %1539 = vmatprep.subr.mxu0 0.0
        %1540 = vmatpush1.msra.mxu0 %v1486
        %1541 = vmatprep.subr.mxu0 0.0
        %1542 = vmatpush1.msra.mxu0 %v1487
        %1543 = vmatprep.subr.mxu0 0.0
        %1544 = vmatpush1.msra.mxu0 %v1488
        %1545 = vmatprep.subr.mxu0 0.0
        %1546 = vmatpush1.msra.mxu0 %v1489
        %1547 = vmatprep.subr.mxu0 0.0
        %1548 = vmatpush1.msra.mxu0 %v1490
        %1549 = vmatprep.subr.mxu0 0.0
        %1550 = vmatpush1.msra.mxu0 %v1491
        %1551 = vmatprep.subr.mxu0 0.0
        %1552 = vmatpush1.msra.mxu0 %v1492
        %1553 = vmatprep.subr.mxu0 0.0
        %1554 = vmatpush1.msra.mxu0 %v1493
        %1555 = vmatprep.subr.mxu0 0.0
        %1556 = vmatpush1.msra.mxu0 %v1494
        %1557 = vmatprep.subr.mxu0 0.0
        %1558 = vmatpush1.msra.mxu0 %v1495
        %1559 = vmatprep.subr.mxu0 0.0
        %1560 = vmatpush1.msra.mxu0 %v1496
        %1561 = vmatprep.subr.mxu0 0.0
        %1562 = vmatpush1.msra.mxu0 %v1497
        %1563 = vmatprep.subr.mxu0 0.0
        %1564 = vmatpush1.msra.mxu0 %v1498
        %1565 = vmatprep.subr.mxu0 0.0
        %1566 = vmatpush1.msra.mxu0 %v1499
        %1567 = vmatprep.mubr.f32.mxu0 %v1501
        %1568 = vmatmul.mubr.f32.gmra.mrb[0].mxu0 %v1467
        %v1569 = vpop.f32.mrb[0].mxu0
        %v1570 = vadd.f32 0.0, %v1569
        %v1571 = vpop.f32.mrb[0].mxu0
        %1572 = vdwg.mxu0
        %v1573 = vld [vmem:[#allocation3] sm:$0xff]
        %v1574 = vld [vmem:[#allocation3 + $0x8] sm:$0xff]
        %v1575 = vld [vmem:[#allocation3 + $0x10] sm:$0xff]
        %v1576 = vld [vmem:[#allocation3 + $0x18] sm:$0xff]
        %v1577 = vld [vmem:[#allocation3 + $0x20] sm:$0xff]
        %v1578 = vld [vmem:[#allocation3 + $0x28] sm:$0xff]
        %v1579 = vld [vmem:[#allocation3 + $0x30] sm:$0xff]
        %v1580 = vld [vmem:[#allocation3 + $0x38] sm:$0xff]
        %v1581 = vld [vmem:[#allocation3 + $0x40] sm:$0xff]
        %v1582 = vld [vmem:[#allocation3 + $0x48] sm:$0xff]
        %v1583 = vld [vmem:[#allocation3 + $0x50] sm:$0xff]
        %v1584 = vld [vmem:[#allocation3 + $0x58] sm:$0xff]
        %v1585 = vld [vmem:[#allocation3 + $0x60] sm:$0xff]
        %v1586 = vld [vmem:[#allocation3 + $0x68] sm:$0xff]
        %v1587 = vld [vmem:[#allocation3 + $0x70] sm:$0xff]
        %v1588 = vld [vmem:[#allocation3 + $0x78] sm:$0xff]
        %v1589 = vld [vmem:[#allocation3 + $0x80] sm:$0xff]
        %v1590 = vld [vmem:[#allocation3 + $0x88] sm:$0xff]
        %v1591 = vld [vmem:[#allocation3 + $0x90] sm:$0xff]
        %v1592 = vld [vmem:[#allocation3 + $0x98] sm:$0xff]
        %v1593 = vld [vmem:[#allocation3 + $0xa0] sm:$0xff]
        %v1594 = vld [vmem:[#allocation3 + $0xa8] sm:$0xff]
        %v1595 = vld [vmem:[#allocation3 + $0xb0] sm:$0xff]
        %v1596 = vld [vmem:[#allocation3 + $0xb8] sm:$0xff]
        %v1597 = vld [vmem:[#allocation3 + $0xc0] sm:$0xff]
        %v1598 = vld [vmem:[#allocation3 + $0xc8] sm:$0xff]
        %v1599 = vld [vmem:[#allocation3 + $0xd0] sm:$0xff]
        %v1600 = vld [vmem:[#allocation3 + $0xd8] sm:$0xff]
        %v1601 = vld [vmem:[#allocation3 + $0xe0] sm:$0xff]
        %v1602 = vld [vmem:[#allocation3 + $0xe8] sm:$0xff]
        %v1603 = vld [vmem:[#allocation3 + $0xf0] sm:$0xff]
        %v1604 = vld [vmem:[#allocation3 + $0xf8] sm:$0xff]
        %1605 = vmatprep.subr.mxu0 0.0
        %1606 = vmatpush1.msra.mxu0 %v1573
        %1607 = vmatprep.subr.mxu0 0.0
        %1608 = vmatpush1.msra.mxu0 %v1574
        %1609 = vmatprep.subr.mxu0 0.0
        %1610 = vmatpush1.msra.mxu0 %v1575
        %1611 = vmatprep.subr.mxu0 0.0
        %1612 = vmatpush1.msra.mxu0 %v1576
        %1613 = vmatprep.subr.mxu0 0.0
        %1614 = vmatpush1.msra.mxu0 %v1577
        %1615 = vmatprep.subr.mxu0 0.0
        %1616 = vmatpush1.msra.mxu0 %v1578
        %1617 = vmatprep.subr.mxu0 0.0
        %1618 = vmatpush1.msra.mxu0 %v1579
        %1619 = vmatprep.subr.mxu0 0.0
        %1620 = vmatpush1.msra.mxu0 %v1580
        %1621 = vmatprep.subr.mxu0 0.0
        %1622 = vmatpush1.msra.mxu0 %v1581
        %1623 = vmatprep.subr.mxu0 0.0
        %1624 = vmatpush1.msra.mxu0 %v1582
        %1625 = vmatprep.subr.mxu0 0.0
        %1626 = vmatpush1.msra.mxu0 %v1583
        %1627 = vmatprep.subr.mxu0 0.0
        %1628 = vmatpush1.msra.mxu0 %v1584
        %1629 = vmatprep.subr.mxu0 0.0
        %1630 = vmatpush1.msra.mxu0 %v1585
        %1631 = vmatprep.subr.mxu0 0.0
        %1632 = vmatpush1.msra.mxu0 %v1586
        %1633 = vmatprep.subr.mxu0 0.0
        %1634 = vmatpush1.msra.mxu0 %v1587
        %1635 = vmatprep.subr.mxu0 0.0
        %1636 = vmatpush1.msra.mxu0 %v1588
        %1637 = vmatprep.subr.mxu0 0.0
        %1638 = vmatpush1.msra.mxu0 %v1589
        %1639 = vmatprep.subr.mxu0 0.0
        %1640 = vmatpush1.msra.mxu0 %v1590
        %1641 = vmatprep.subr.mxu0 0.0
        %1642 = vmatpush1.msra.mxu0 %v1591
        %1643 = vmatprep.subr.mxu0 0.0
        %1644 = vmatpush1.msra.mxu0 %v1592
        %1645 = vmatprep.subr.mxu0 0.0
        %1646 = vmatpush1.msra.mxu0 %v1593
        %1647 = vmatprep.subr.mxu0 0.0
        %1648 = vmatpush1.msra.mxu0 %v1594
        %1649 = vmatprep.subr.mxu0 0.0
        %1650 = vmatpush1.msra.mxu0 %v1595
        %1651 = vmatprep.subr.mxu0 0.0
        %1652 = vmatpush1.msra.mxu0 %v1596
        %1653 = vmatprep.subr.mxu0 0.0
        %1654 = vmatpush1.msra.mxu0 %v1597
        %1655 = vmatprep.subr.mxu0 0.0
        %1656 = vmatpush1.msra.mxu0 %v1598
        %1657 = vmatprep.subr.mxu0 0.0
        %1658 = vmatpush1.msra.mxu0 %v1599
        %1659 = vmatprep.subr.mxu0 0.0
        %1660 = vmatpush1.msra.mxu0 %v1600
        %1661 = vmatprep.subr.mxu0 0.0
        %1662 = vmatpush1.msra.mxu0 %v1601
        %1663 = vmatprep.subr.mxu0 0.0
        %1664 = vmatpush1.msra.mxu0 %v1602
        %1665 = vmatprep.subr.mxu0 0.0
        %1666 = vmatpush1.msra.mxu0 %v1603
        %1667 = vmatprep.subr.mxu0 0.0
        %1668 = vmatpush1.msra.mxu0 %v1604
        %1669 = vmatprep.mubr.f32.mxu0 %v1501
        %1670 = vmatmul.mubr.f32.gmra.mrb[0].mxu0 %v1467
        %v1671 = vpop.f32.mrb[0].mxu0
        %v1672 = vadd.f32 0.0, %v1671
        %v1673 = vpop.f32.mrb[0].mxu0
        %1674 = vdwg.mxu0
        %v1675 = vmul.f32 %v1570, 3.0517578e-05
        %v1676 = vmul.f32 %v1672, 3.0517578e-05
        %v1677 = vmul.f32 %v1675, %v1675
        %v1678 = vsub.f32 %v1676, %v1677
        %v1679 = vadd.f32 %v1678, 1e-05
        %v1680 = vrsqrt.pop %v1679
        %v1681 = vld [vmem:[%s4] sm:$0xf]
        %v1682 = vmul.f32 %v1681, %v1680
        %v1683 = vld [vmem:[%s5] sm:$0xf]
        %v1684 = vmul.f32 %v1675, %v1682
        %v1685 = vsub.f32 %v1683, %v1684
        %v1686 = vld [vmem:[%s3] sm:$0xff]
        %v1687 = vld [vmem:[%s3 + $0x8] sm:$0xff]
        %v1688 = vld [vmem:[%s3 + $0x10] sm:$0xff]
        %v1689 = vld [vmem:[%s3 + $0x18] sm:$0xff]
        %v1690 = vld [vmem:[%s3 + $0x20] sm:$0xff]
        %v1691 = vld [vmem:[%s3 + $0x28] sm:$0xff]
        %v1692 = vld [vmem:[%s3 + $0x30] sm:$0xff]
        %v1693 = vld [vmem:[%s3 + $0x38] sm:$0xff]
        %v1694 = vld [vmem:[%s3 + $0x40] sm:$0xff]
        %v1695 = vld [vmem:[%s3 + $0x48] sm:$0xff]
        %v1696 = vld [vmem:[%s3 + $0x50] sm:$0xff]
        %v1697 = vld [vmem:[%s3 + $0x58] sm:$0xff]
        %v1698 = vld [vmem:[%s3 + $0x60] sm:$0xff]
        %v1699 = vld [vmem:[%s3 + $0x68] sm:$0xff]
        %v1700 = vld [vmem:[%s3 + $0x70] sm:$0xff]
        %v1701 = vld [vmem:[%s3 + $0x78] sm:$0xff]
        %v1702 = vld [vmem:[%s3 + $0x80] sm:$0xff]
        %v1703 = vld [vmem:[%s3 + $0x88] sm:$0xff]
        %v1704 = vld [vmem:[%s3 + $0x90] sm:$0xff]
        %v1705 = vld [vmem:[%s3 + $0x98] sm:$0xff]
        %v1706 = vld [vmem:[%s3 + $0xa0] sm:$0xff]
        %v1707 = vld [vmem:[%s3 + $0xa8] sm:$0xff]
        %v1708 = vld [vmem:[%s3 + $0xb0] sm:$0xff]
        %v1709 = vld [vmem:[%s3 + $0xb8] sm:$0xff]
        %v1710 = vld [vmem:[%s3 + $0xc0] sm:$0xff]
        %v1711 = vld [vmem:[%s3 + $0xc8] sm:$0xff]
        %v1712 = vld [vmem:[%s3 + $0xd0] sm:$0xff]
        %v1713 = vld [vmem:[%s3 + $0xd8] sm:$0xff]
        %v1714 = vld [vmem:[%s3 + $0xe0] sm:$0xff]
        %v1715 = vld [vmem:[%s3 + $0xe8] sm:$0xff]
        %v1716 = vld [vmem:[%s3 + $0xf0] sm:$0xff]
        %v1717 = vld [vmem:[%s3 + $0xf8] sm:$0xff]
        %v1719 = vsel %vm399, %v1686, 0
        %v1722 = vsel %vm399, %v1687, 0
        %v1725 = vsel %vm399, %v1688, 0
        %v1728 = vsel %vm399, %v1689, 0
        %v1731 = vsel %vm399, %v1690, 0
        %v1734 = vsel %vm399, %v1691, 0
        %v1737 = vsel %vm399, %v1692, 0
        %v1740 = vsel %vm399, %v1693, 0
        %v1743 = vsel %vm399, %v1694, 0
        %v1746 = vsel %vm399, %v1695, 0
        %v1749 = vsel %vm399, %v1696, 0
        %v1752 = vsel %vm399, %v1697, 0
        %v1755 = vsel %vm399, %v1698, 0
        %v1758 = vsel %vm399, %v1699, 0
        %v1761 = vsel %vm399, %v1700, 0
        %v1764 = vsel %vm399, %v1701, 0
        %v1767 = vsel %vm399, %v1702, 0
        %v1770 = vsel %vm399, %v1703, 0
        %v1773 = vsel %vm399, %v1704, 0
        %v1776 = vsel %vm399, %v1705, 0
        %v1779 = vsel %vm399, %v1706, 0
        %v1782 = vsel %vm399, %v1707, 0
        %v1785 = vsel %vm399, %v1708, 0
        %v1788 = vsel %vm399, %v1709, 0
        %v1791 = vsel %vm399, %v1710, 0
        %v1794 = vsel %vm399, %v1711, 0
        %v1797 = vsel %vm399, %v1712, 0
        %v1800 = vsel %vm399, %v1713, 0
        %v1803 = vsel %vm399, %v1714, 0
        %v1806 = vsel %vm399, %v1715, 0
        %v1809 = vsel %vm399, %v1716, 0
        %v1812 = vsel %vm399, %v1717, 0
        %v1815 = vsel %vm496, %v1682, 0
        %1817 = vmatprep.subr.mxu0 0.0
        %1818 = vmatpush1.msra.mxu0 %v1815
        %1819 = vmatprep.subr.mxu0 0.0
        %1820 = vmatpush1.msra.mxu0 0.0
        %1821 = vmatprep.subr.mxu0 0.0
        %1822 = vmatpush1.msra.mxu0 0.0
        %1823 = vmatprep.subr.mxu0 0.0
        %1824 = vmatpush1.msra.mxu0 0.0
        %1825 = vmatprep.subr.mxu0 0.0
        %1826 = vmatpush1.msra.mxu0 0.0
        %1827 = vmatprep.subr.mxu0 0.0
        %1828 = vmatpush1.msra.mxu0 0.0
        %1829 = vmatprep.subr.mxu0 0.0
        %1830 = vmatpush1.msra.mxu0 0.0
        %1831 = vmatprep.subr.mxu0 0.0
        %1832 = vmatpush1.msra.mxu0 0.0
        %1833 = vmatprep.subr.mxu0 0.0
        %1834 = vmatpush1.msra.mxu0 0.0
        %1835 = vmatprep.subr.mxu0 0.0
        %1836 = vmatpush1.msra.mxu0 0.0
        %1837 = vmatprep.subr.mxu0 0.0
        %1838 = vmatpush1.msra.mxu0 0.0
        %1839 = vmatprep.subr.mxu0 0.0
        %1840 = vmatpush1.msra.mxu0 0.0
        %1841 = vmatprep.subr.mxu0 0.0
        %1842 = vmatpush1.msra.mxu0 0.0
        %1843 = vmatprep.subr.mxu0 0.0
        %1844 = vmatpush1.msra.mxu0 0.0
        %1845 = vmatprep.subr.mxu0 0.0
        %1846 = vmatpush1.msra.mxu0 0.0
        %1847 = vmatprep.subr.mxu0 0.0
        %1848 = vmatpush1.msra.mxu0 0.0
        %1849 = vmatprep.subr.mxu0 0.0
        %1850 = vmatpush1.msra.mxu0 0.0
        %1851 = vmatprep.subr.mxu0 0.0
        %1852 = vmatpush1.msra.mxu0 0.0
        %1853 = vmatprep.subr.mxu0 0.0
        %1854 = vmatpush1.msra.mxu0 0.0
        %1855 = vmatprep.subr.mxu0 0.0
        %1856 = vmatpush1.msra.mxu0 0.0
        %1857 = vmatprep.subr.mxu0 0.0
        %1858 = vmatpush1.msra.mxu0 0.0
        %1859 = vmatprep.subr.mxu0 0.0
        %1860 = vmatpush1.msra.mxu0 0.0
        %1861 = vmatprep.subr.mxu0 0.0
        %1862 = vmatpush1.msra.mxu0 0.0
        %1863 = vmatprep.subr.mxu0 0.0
        %1864 = vmatpush1.msra.mxu0 0.0
        %1865 = vmatprep.subr.mxu0 0.0
        %1866 = vmatpush1.msra.mxu0 0.0
        %1867 = vmatprep.subr.mxu0 0.0
        %1868 = vmatpush1.msra.mxu0 0.0
        %1869 = vmatprep.subr.mxu0 0.0
        %1870 = vmatpush1.msra.mxu0 0.0
        %1871 = vmatprep.subr.mxu0 0.0
        %1872 = vmatpush1.msra.mxu0 0.0
        %1873 = vmatprep.subr.mxu0 0.0
        %1874 = vmatpush1.msra.mxu0 0.0
        %1875 = vmatprep.subr.mxu0 0.0
        %1876 = vmatpush1.msra.mxu0 0.0
        %1877 = vmatprep.subr.mxu0 0.0
        %1878 = vmatpush1.msra.mxu0 0.0
        %1879 = vmatprep.subr.mxu0 0.0
        %1880 = vmatpush1.msra.mxu0 0.0
        %1881 = vmatprep.mubr.f32.mxu0 0.0
        %1882 = vmatmul.mubr.f32.gmra.mrb[0].mxu0 %v1719
        %v1883 = vpop.f32.mrb[0].mxu0
        %v1884 = vadd.f32 0.0, %v1883
        %v1885 = vpop.f32.mrb[0].mxu0
        %1886 = vmatprep.mubr.f32.mxu0 0.0
        %1887 = vmatmul.mubr.f32.gmra.mrb[0].mxu0 %v1722
        %v1888 = vpop.f32.mrb[0].mxu0
        %v1889 = vadd.f32 0.0, %v1888
        %v1890 = vpop.f32.mrb[0].mxu0
        %1891 = vmatprep.mubr.f32.mxu0 0.0
        %1892 = vmatmul.mubr.f32.gmra.mrb[0].mxu0 %v1725
        %v1893 = vpop.f32.mrb[0].mxu0
        %v1894 = vadd.f32 0.0, %v1893
        %v1895 = vpop.f32.mrb[0].mxu0
        %1896 = vmatprep.mubr.f32.mxu0 0.0
        %1897 = vmatmul.mubr.f32.gmra.mrb[0].mxu0 %v1728
        %v1898 = vpop.f32.mrb[0].mxu0
        %v1899 = vadd.f32 0.0, %v1898
        %v1900 = vpop.f32.mrb[0].mxu0
        %1901 = vmatprep.mubr.f32.mxu0 0.0
        %1902 = vmatmul.mubr.f32.gmra.mrb[0].mxu0 %v1731
        %v1903 = vpop.f32.mrb[0].mxu0
        %v1904 = vadd.f32 0.0, %v1903
        %v1905 = vpop.f32.mrb[0].mxu0
        %1906 = vmatprep.mubr.f32.mxu0 0.0
        %1907 = vmatmul.mubr.f32.gmra.mrb[0].mxu0 %v1734
        %v1908 = vpop.f32.mrb[0].mxu0
        %v1909 = vadd.f32 0.0, %v1908
        %v1910 = vpop.f32.mrb[0].mxu0
        %1911 = vmatprep.mubr.f32.mxu0 0.0
        %1912 = vmatmul.mubr.f32.gmra.mrb[0].mxu0 %v1737
        %v1913 = vpop.f32.mrb[0].mxu0
        %v1914 = vadd.f32 0.0, %v1913
        %v1915 = vpop.f32.mrb[0].mxu0
        %1916 = vmatprep.mubr.f32.mxu0 0.0
        %1917 = vmatmul.mubr.f32.gmra.mrb[0].mxu0 %v1740
        %v1918 = vpop.f32.mrb[0].mxu0
        %v1919 = vadd.f32 0.0, %v1918
        %v1920 = vpop.f32.mrb[0].mxu0
        %1921 = vmatprep.mubr.f32.mxu0 0.0
        %1922 = vmatmul.mubr.f32.gmra.mrb[0].mxu0 %v1743
        %v1923 = vpop.f32.mrb[0].mxu0
        %v1924 = vadd.f32 0.0, %v1923
        %v1925 = vpop.f32.mrb[0].mxu0
        %1926 = vmatprep.mubr.f32.mxu0 0.0
        %1927 = vmatmul.mubr.f32.gmra.mrb[0].mxu0 %v1746
        %v1928 = vpop.f32.mrb[0].mxu0
        %v1929 = vadd.f32 0.0, %v1928
        %v1930 = vpop.f32.mrb[0].mxu0
        %1931 = vmatprep.mubr.f32.mxu0 0.0
        %1932 = vmatmul.mubr.f32.gmra.mrb[0].mxu0 %v1749
        %v1933 = vpop.f32.mrb[0].mxu0
        %v1934 = vadd.f32 0.0, %v1933
        %v1935 = vpop.f32.mrb[0].mxu0
        %1936 = vmatprep.mubr.f32.mxu0 0.0
        %1937 = vmatmul.mubr.f32.gmra.mrb[0].mxu0 %v1752
        %v1938 = vpop.f32.mrb[0].mxu0
        %v1939 = vadd.f32 0.0, %v1938
        %v1940 = vpop.f32.mrb[0].mxu0
        %1941 = vmatprep.mubr.f32.mxu0 0.0
        %1942 = vmatmul.mubr.f32.gmra.mrb[0].mxu0 %v1755
        %v1943 = vpop.f32.mrb[0].mxu0
        %v1944 = vadd.f32 0.0, %v1943
        %v1945 = vpop.f32.mrb[0].mxu0
        %1946 = vmatprep.mubr.f32.mxu0 0.0
        %1947 = vmatmul.mubr.f32.gmra.mrb[0].mxu0 %v1758
        %v1948 = vpop.f32.mrb[0].mxu0
        %v1949 = vadd.f32 0.0, %v1948
        %v1950 = vpop.f32.mrb[0].mxu0
        %1951 = vmatprep.mubr.f32.mxu0 0.0
        %1952 = vmatmul.mubr.f32.gmra.mrb[0].mxu0 %v1761
        %v1953 = vpop.f32.mrb[0].mxu0
        %v1954 = vadd.f32 0.0, %v1953
        %v1955 = vpop.f32.mrb[0].mxu0
        %1956 = vmatprep.mubr.f32.mxu0 0.0
        %1957 = vmatmul.mubr.f32.gmra.mrb[0].mxu0 %v1764
        %v1958 = vpop.f32.mrb[0].mxu0
        %v1959 = vadd.f32 0.0, %v1958
        %v1960 = vpop.f32.mrb[0].mxu0
        %1961 = vmatprep.mubr.f32.mxu0 0.0
        %1962 = vmatmul.mubr.f32.gmra.mrb[0].mxu0 %v1767
        %v1963 = vpop.f32.mrb[0].mxu0
        %v1964 = vadd.f32 0.0, %v1963
        %v1965 = vpop.f32.mrb[0].mxu0
        %1966 = vmatprep.mubr.f32.mxu0 0.0
        %1967 = vmatmul.mubr.f32.gmra.mrb[0].mxu0 %v1770
        %v1968 = vpop.f32.mrb[0].mxu0
        %v1969 = vadd.f32 0.0, %v1968
        %v1970 = vpop.f32.mrb[0].mxu0
        %1971 = vmatprep.mubr.f32.mxu0 0.0
        %1972 = vmatmul.mubr.f32.gmra.mrb[0].mxu0 %v1773
        %v1973 = vpop.f32.mrb[0].mxu0
        %v1974 = vadd.f32 0.0, %v1973
        %v1975 = vpop.f32.mrb[0].mxu0
        %1976 = vmatprep.mubr.f32.mxu0 0.0
        %1977 = vmatmul.mubr.f32.gmra.mrb[0].mxu0 %v1776
        %v1978 = vpop.f32.mrb[0].mxu0
        %v1979 = vadd.f32 0.0, %v1978
        %v1980 = vpop.f32.mrb[0].mxu0
        %1981 = vmatprep.mubr.f32.mxu0 0.0
        %1982 = vmatmul.mubr.f32.gmra.mrb[0].mxu0 %v1779
        %v1983 = vpop.f32.mrb[0].mxu0
        %v1984 = vadd.f32 0.0, %v1983
        %v1985 = vpop.f32.mrb[0].mxu0
        %1986 = vmatprep.mubr.f32.mxu0 0.0
        %1987 = vmatmul.mubr.f32.gmra.mrb[0].mxu0 %v1782
        %v1988 = vpop.f32.mrb[0].mxu0
        %v1989 = vadd.f32 0.0, %v1988
        %v1990 = vpop.f32.mrb[0].mxu0
        %1991 = vmatprep.mubr.f32.mxu0 0.0
        %1992 = vmatmul.mubr.f32.gmra.mrb[0].mxu0 %v1785
        %v1993 = vpop.f32.mrb[0].mxu0
        %v1994 = vadd.f32 0.0, %v1993
        %v1995 = vpop.f32.mrb[0].mxu0
        %1996 = vmatprep.mubr.f32.mxu0 0.0
        %1997 = vmatmul.mubr.f32.gmra.mrb[0].mxu0 %v1788
        %v1998 = vpop.f32.mrb[0].mxu0
        %v1999 = vadd.f32 0.0, %v1998
        %v2000 = vpop.f32.mrb[0].mxu0
        %2001 = vmatprep.mubr.f32.mxu0 0.0
        %2002 = vmatmul.mubr.f32.gmra.mrb[0].mxu0 %v1791
        %v2003 = vpop.f32.mrb[0].mxu0
        %v2004 = vadd.f32 0.0, %v2003
        %v2005 = vpop.f32.mrb[0].mxu0
        %2006 = vmatprep.mubr.f32.mxu0 0.0
        %2007 = vmatmul.mubr.f32.gmra.mrb[0].mxu0 %v1794
        %v2008 = vpop.f32.mrb[0].mxu0
        %v2009 = vadd.f32 0.0, %v2008
        %v2010 = vpop.f32.mrb[0].mxu0
        %2011 = vmatprep.mubr.f32.mxu0 0.0
        %2012 = vmatmul.mubr.f32.gmra.mrb[0].mxu0 %v1797
        %v2013 = vpop.f32.mrb[0].mxu0
        %v2014 = vadd.f32 0.0, %v2013
        %v2015 = vpop.f32.mrb[0].mxu0
        %2016 = vmatprep.mubr.f32.mxu0 0.0
        %2017 = vmatmul.mubr.f32.gmra.mrb[0].mxu0 %v1800
        %v2018 = vpop.f32.mrb[0].mxu0
        %v2019 = vadd.f32 0.0, %v2018
        %v2020 = vpop.f32.mrb[0].mxu0
        %2021 = vmatprep.mubr.f32.mxu0 0.0
        %2022 = vmatmul.mubr.f32.gmra.mrb[0].mxu0 %v1803
        %v2023 = vpop.f32.mrb[0].mxu0
        %v2024 = vadd.f32 0.0, %v2023
        %v2025 = vpop.f32.mrb[0].mxu0
        %2026 = vmatprep.mubr.f32.mxu0 0.0
        %2027 = vmatmul.mubr.f32.gmra.mrb[0].mxu0 %v1806
        %v2028 = vpop.f32.mrb[0].mxu0
        %v2029 = vadd.f32 0.0, %v2028
        %v2030 = vpop.f32.mrb[0].mxu0
        %2031 = vmatprep.mubr.f32.mxu0 0.0
        %2032 = vmatmul.mubr.f32.gmra.mrb[0].mxu0 %v1809
        %v2033 = vpop.f32.mrb[0].mxu0
        %v2034 = vadd.f32 0.0, %v2033
        %v2035 = vpop.f32.mrb[0].mxu0
        %2036 = vmatprep.mubr.f32.mxu0 0.0
        %2037 = vmatmul.mubr.f32.gmra.mrb[0].mxu0 %v1812
        %v2038 = vpop.f32.mrb[0].mxu0
        %v2039 = vadd.f32 0.0, %v2038
        %v2040 = vpop.f32.mrb[0].mxu0
        %2041 = vdwg.mxu0
        %2042 = vst.msk [vmem:[%s6] sm:$0xff] %vm1047, %v1884
        %2043 = vst.msk [vmem:[%s6 + $0x8] sm:$0xff] %vm1047, %v1889
        %2044 = vst.msk [vmem:[%s6 + $0x10] sm:$0xff] %vm1047, %v1894
        %2045 = vst.msk [vmem:[%s6 + $0x18] sm:$0xff] %vm1047, %v1899
        %2046 = vst.msk [vmem:[%s6 + $0x20] sm:$0xff] %vm1047, %v1904
        %2047 = vst.msk [vmem:[%s6 + $0x28] sm:$0xff] %vm1047, %v1909
        %2048 = vst.msk [vmem:[%s6 + $0x30] sm:$0xff] %vm1047, %v1914
        %2049 = vst.msk [vmem:[%s6 + $0x38] sm:$0xff] %vm1047, %v1919
        %2050 = vst.msk [vmem:[%s6 + $0x40] sm:$0xff] %vm1047, %v1924
        %2051 = vst.msk [vmem:[%s6 + $0x48] sm:$0xff] %vm1047, %v1929
        %2052 = vst.msk [vmem:[%s6 + $0x50] sm:$0xff] %vm1047, %v1934
        %2053 = vst.msk [vmem:[%s6 + $0x58] sm:$0xff] %vm1047, %v1939
        %2054 = vst.msk [vmem:[%s6 + $0x60] sm:$0xff] %vm1047, %v1944
        %2055 = vst.msk [vmem:[%s6 + $0x68] sm:$0xff] %vm1047, %v1949
        %2056 = vst.msk [vmem:[%s6 + $0x70] sm:$0xff] %vm1047, %v1954
        %2057 = vst.msk [vmem:[%s6 + $0x78] sm:$0xff] %vm1047, %v1959
        %2058 = vst.msk [vmem:[%s6 + $0x80] sm:$0xff] %vm1047, %v1964
        %2059 = vst.msk [vmem:[%s6 + $0x88] sm:$0xff] %vm1047, %v1969
        %2060 = vst.msk [vmem:[%s6 + $0x90] sm:$0xff] %vm1047, %v1974
        %2061 = vst.msk [vmem:[%s6 + $0x98] sm:$0xff] %vm1047, %v1979
        %2062 = vst.msk [vmem:[%s6 + $0xa0] sm:$0xff] %vm1047, %v1984
        %2063 = vst.msk [vmem:[%s6 + $0xa8] sm:$0xff] %vm1047, %v1989
        %2064 = vst.msk [vmem:[%s6 + $0xb0] sm:$0xff] %vm1047, %v1994
        %2065 = vst.msk [vmem:[%s6 + $0xb8] sm:$0xff] %vm1047, %v1999
        %2066 = vst.msk [vmem:[%s6 + $0xc0] sm:$0xff] %vm1047, %v2004
        %2067 = vst.msk [vmem:[%s6 + $0xc8] sm:$0xff] %vm1047, %v2009
        %2068 = vst.msk [vmem:[%s6 + $0xd0] sm:$0xff] %vm1047, %v2014
        %2069 = vst.msk [vmem:[%s6 + $0xd8] sm:$0xff] %vm1047, %v2019
        %2070 = vst.msk [vmem:[%s6 + $0xe0] sm:$0xff] %vm1047, %v2024
        %2071 = vst.msk [vmem:[%s6 + $0xe8] sm:$0xff] %vm1047, %v2029
        %2072 = vst.msk [vmem:[%s6 + $0xf0] sm:$0xff] %vm1047, %v2034
        %2073 = vst.msk [vmem:[%s6 + $0xf8] sm:$0xff] %vm1047, %v2039
        %v2074 = vld [vmem:[%s3] sm:$0xff]
        %v2075 = vld [vmem:[%s3 + $0x8] sm:$0xff]
        %v2076 = vld [vmem:[%s3 + $0x10] sm:$0xff]
        %v2077 = vld [vmem:[%s3 + $0x18] sm:$0xff]
        %v2078 = vld [vmem:[%s3 + $0x20] sm:$0xff]
        %v2079 = vld [vmem:[%s3 + $0x28] sm:$0xff]
        %v2080 = vld [vmem:[%s3 + $0x30] sm:$0xff]
        %v2081 = vld [vmem:[%s3 + $0x38] sm:$0xff]
        %v2082 = vld [vmem:[%s3 + $0x40] sm:$0xff]
        %v2083 = vld [vmem:[%s3 + $0x48] sm:$0xff]
        %v2084 = vld [vmem:[%s3 + $0x50] sm:$0xff]
        %v2085 = vld [vmem:[%s3 + $0x58] sm:$0xff]
        %v2086 = vld [vmem:[%s3 + $0x60] sm:$0xff]
        %v2087 = vld [vmem:[%s3 + $0x68] sm:$0xff]
        %v2088 = vld [vmem:[%s3 + $0x70] sm:$0xff]
        %v2089 = vld [vmem:[%s3 + $0x78] sm:$0xff]
        %v2090 = vld [vmem:[%s3 + $0x80] sm:$0xff]
        %v2091 = vld [vmem:[%s3 + $0x88] sm:$0xff]
        %v2092 = vld [vmem:[%s3 + $0x90] sm:$0xff]
        %v2093 = vld [vmem:[%s3 + $0x98] sm:$0xff]
        %v2094 = vld [vmem:[%s3 + $0xa0] sm:$0xff]
        %v2095 = vld [vmem:[%s3 + $0xa8] sm:$0xff]
        %v2096 = vld [vmem:[%s3 + $0xb0] sm:$0xff]
        %v2097 = vld [vmem:[%s3 + $0xb8] sm:$0xff]
        %v2098 = vld [vmem:[%s3 + $0xc0] sm:$0xff]
        %v2099 = vld [vmem:[%s3 + $0xc8] sm:$0xff]
        %v2100 = vld [vmem:[%s3 + $0xd0] sm:$0xff]
        %v2101 = vld [vmem:[%s3 + $0xd8] sm:$0xff]
        %v2102 = vld [vmem:[%s3 + $0xe0] sm:$0xff]
        %v2103 = vld [vmem:[%s3 + $0xe8] sm:$0xff]
        %v2104 = vld [vmem:[%s3 + $0xf0] sm:$0xff]
        %v2105 = vld [vmem:[%s3 + $0xf8] sm:$0xff]
        %v2107 = vsel %vm399, %v2074, 0
        %v2110 = vsel %vm399, %v2075, 0
        %v2113 = vsel %vm399, %v2076, 0
        %v2116 = vsel %vm399, %v2077, 0
        %v2119 = vsel %vm399, %v2078, 0
        %v2122 = vsel %vm399, %v2079, 0
        %v2125 = vsel %vm399, %v2080, 0
        %v2128 = vsel %vm399, %v2081, 0
        %v2131 = vsel %vm399, %v2082, 0
        %v2134 = vsel %vm399, %v2083, 0
        %v2137 = vsel %vm399, %v2084, 0
        %v2140 = vsel %vm399, %v2085, 0
        %v2143 = vsel %vm399, %v2086, 0
        %v2146 = vsel %vm399, %v2087, 0
        %v2149 = vsel %vm399, %v2088, 0
        %v2152 = vsel %vm399, %v2089, 0
        %v2155 = vsel %vm399, %v2090, 0
        %v2158 = vsel %vm399, %v2091, 0
        %v2161 = vsel %vm399, %v2092, 0
        %v2164 = vsel %vm399, %v2093, 0
        %v2167 = vsel %vm399, %v2094, 0
        %v2170 = vsel %vm399, %v2095, 0
        %v2173 = vsel %vm399, %v2096, 0
        %v2176 = vsel %vm399, %v2097, 0
        %v2179 = vsel %vm399, %v2098, 0
        %v2182 = vsel %vm399, %v2099, 0
        %v2185 = vsel %vm399, %v2100, 0
        %v2188 = vsel %vm399, %v2101, 0
        %v2191 = vsel %vm399, %v2102, 0
        %v2194 = vsel %vm399, %v2103, 0
        %v2197 = vsel %vm399, %v2104, 0
        %v2200 = vsel %vm399, %v2105, 0
        %v2203 = vsel %vm496, %v1685, 0
        %2205 = vmatprep.subr.mxu0 0.0
        %2206 = vmatpush1.msra.mxu0 %v2203
        %2207 = vmatprep.subr.mxu0 0.0
        %2208 = vmatpush1.msra.mxu0 0.0
        %2209 = vmatprep.subr.mxu0 0.0
        %2210 = vmatpush1.msra.mxu0 0.0
        %2211 = vmatprep.subr.mxu0 0.0
        %2212 = vmatpush1.msra.mxu0 0.0
        %2213 = vmatprep.subr.mxu0 0.0
        %2214 = vmatpush1.msra.mxu0 0.0
        %2215 = vmatprep.subr.mxu0 0.0
        %2216 = vmatpush1.msra.mxu0 0.0
        %2217 = vmatprep.subr.mxu0 0.0
        %2218 = vmatpush1.msra.mxu0 0.0
        %2219 = vmatprep.subr.mxu0 0.0
        %2220 = vmatpush1.msra.mxu0 0.0
        %2221 = vmatprep.subr.mxu0 0.0
        %2222 = vmatpush1.msra.mxu0 0.0
        %2223 = vmatprep.subr.mxu0 0.0
        %2224 = vmatpush1.msra.mxu0 0.0
        %2225 = vmatprep.subr.mxu0 0.0
        %2226 = vmatpush1.msra.mxu0 0.0
        %2227 = vmatprep.subr.mxu0 0.0
        %2228 = vmatpush1.msra.mxu0 0.0
        %2229 = vmatprep.subr.mxu0 0.0
        %2230 = vmatpush1.msra.mxu0 0.0
        %2231 = vmatprep.subr.mxu0 0.0
        %2232 = vmatpush1.msra.mxu0 0.0
        %2233 = vmatprep.subr.mxu0 0.0
        %2234 = vmatpush1.msra.mxu0 0.0
        %2235 = vmatprep.subr.mxu0 0.0
        %2236 = vmatpush1.msra.mxu0 0.0
        %2237 = vmatprep.subr.mxu0 0.0
        %2238 = vmatpush1.msra.mxu0 0.0
        %2239 = vmatprep.subr.mxu0 0.0
        %2240 = vmatpush1.msra.mxu0 0.0
        %2241 = vmatprep.subr.mxu0 0.0
        %2242 = vmatpush1.msra.mxu0 0.0
        %2243 = vmatprep.subr.mxu0 0.0
        %2244 = vmatpush1.msra.mxu0 0.0
        %2245 = vmatprep.subr.mxu0 0.0
        %2246 = vmatpush1.msra.mxu0 0.0
        %2247 = vmatprep.subr.mxu0 0.0
        %2248 = vmatpush1.msra.mxu0 0.0
        %2249 = vmatprep.subr.mxu0 0.0
        %2250 = vmatpush1.msra.mxu0 0.0
        %2251 = vmatprep.subr.mxu0 0.0
        %2252 = vmatpush1.msra.mxu0 0.0
        %2253 = vmatprep.subr.mxu0 0.0
        %2254 = vmatpush1.msra.mxu0 0.0
        %2255 = vmatprep.subr.mxu0 0.0
        %2256 = vmatpush1.msra.mxu0 0.0
        %2257 = vmatprep.subr.mxu0 0.0
        %2258 = vmatpush1.msra.mxu0 0.0
        %2259 = vmatprep.subr.mxu0 0.0
        %2260 = vmatpush1.msra.mxu0 0.0
        %2261 = vmatprep.subr.mxu0 0.0
        %2262 = vmatpush1.msra.mxu0 0.0
        %2263 = vmatprep.subr.mxu0 0.0
        %2264 = vmatpush1.msra.mxu0 0.0
        %2265 = vmatprep.subr.mxu0 0.0
        %2266 = vmatpush1.msra.mxu0 0.0
        %2267 = vmatprep.subr.mxu0 0.0
        %2268 = vmatpush1.msra.mxu0 0.0
        %2269 = vmatprep.mubr.f32.mxu0 0.0
        %2270 = vmatmul.mubr.f32.gmra.mrb[0].mxu0 %v2107
        %v2271 = vpop.f32.mrb[0].mxu0
        %v2272 = vadd.f32 0.0, %v2271
        %v2273 = vpop.f32.mrb[0].mxu0
        %2274 = vmatprep.mubr.f32.mxu0 0.0
        %2275 = vmatmul.mubr.f32.gmra.mrb[0].mxu0 %v2110
        %v2276 = vpop.f32.mrb[0].mxu0
        %v2277 = vadd.f32 0.0, %v2276
        %v2278 = vpop.f32.mrb[0].mxu0
        %2279 = vmatprep.mubr.f32.mxu0 0.0
        %2280 = vmatmul.mubr.f32.gmra.mrb[0].mxu0 %v2113
        %v2281 = vpop.f32.mrb[0].mxu0
        %v2282 = vadd.f32 0.0, %v2281
        %v2283 = vpop.f32.mrb[0].mxu0
        %2284 = vmatprep.mubr.f32.mxu0 0.0
        %2285 = vmatmul.mubr.f32.gmra.mrb[0].mxu0 %v2116
        %v2286 = vpop.f32.mrb[0].mxu0
        %v2287 = vadd.f32 0.0, %v2286
        %v2288 = vpop.f32.mrb[0].mxu0
        %2289 = vmatprep.mubr.f32.mxu0 0.0
        %2290 = vmatmul.mubr.f32.gmra.mrb[0].mxu0 %v2119
        %v2291 = vpop.f32.mrb[0].mxu0
        %v2292 = vadd.f32 0.0, %v2291
        %v2293 = vpop.f32.mrb[0].mxu0
        %2294 = vmatprep.mubr.f32.mxu0 0.0
        %2295 = vmatmul.mubr.f32.gmra.mrb[0].mxu0 %v2122
        %v2296 = vpop.f32.mrb[0].mxu0
        %v2297 = vadd.f32 0.0, %v2296
        %v2298 = vpop.f32.mrb[0].mxu0
        %2299 = vmatprep.mubr.f32.mxu0 0.0
        %2300 = vmatmul.mubr.f32.gmra.mrb[0].mxu0 %v2125
        %v2301 = vpop.f32.mrb[0].mxu0
        %v2302 = vadd.f32 0.0, %v2301
        %v2303 = vpop.f32.mrb[0].mxu0
        %2304 = vmatprep.mubr.f32.mxu0 0.0
        %2305 = vmatmul.mubr.f32.gmra.mrb[0].mxu0 %v2128
        %v2306 = vpop.f32.mrb[0].mxu0
        %v2307 = vadd.f32 0.0, %v2306
        %v2308 = vpop.f32.mrb[0].mxu0
        %2309 = vmatprep.mubr.f32.mxu0 0.0
        %2310 = vmatmul.mubr.f32.gmra.mrb[0].mxu0 %v2131
        %v2311 = vpop.f32.mrb[0].mxu0
        %v2312 = vadd.f32 0.0, %v2311
        %v2313 = vpop.f32.mrb[0].mxu0
        %2314 = vmatprep.mubr.f32.mxu0 0.0
        %2315 = vmatmul.mubr.f32.gmra.mrb[0].mxu0 %v2134
        %v2316 = vpop.f32.mrb[0].mxu0
        %v2317 = vadd.f32 0.0, %v2316
        %v2318 = vpop.f32.mrb[0].mxu0
        %2319 = vmatprep.mubr.f32.mxu0 0.0
        %2320 = vmatmul.mubr.f32.gmra.mrb[0].mxu0 %v2137
        %v2321 = vpop.f32.mrb[0].mxu0
        %v2322 = vadd.f32 0.0, %v2321
        %v2323 = vpop.f32.mrb[0].mxu0
        %2324 = vmatprep.mubr.f32.mxu0 0.0
        %2325 = vmatmul.mubr.f32.gmra.mrb[0].mxu0 %v2140
        %v2326 = vpop.f32.mrb[0].mxu0
        %v2327 = vadd.f32 0.0, %v2326
        %v2328 = vpop.f32.mrb[0].mxu0
        %2329 = vmatprep.mubr.f32.mxu0 0.0
        %2330 = vmatmul.mubr.f32.gmra.mrb[0].mxu0 %v2143
        %v2331 = vpop.f32.mrb[0].mxu0
        %v2332 = vadd.f32 0.0, %v2331
        %v2333 = vpop.f32.mrb[0].mxu0
        %2334 = vmatprep.mubr.f32.mxu0 0.0
        %2335 = vmatmul.mubr.f32.gmra.mrb[0].mxu0 %v2146
        %v2336 = vpop.f32.mrb[0].mxu0
        %v2337 = vadd.f32 0.0, %v2336
        %v2338 = vpop.f32.mrb[0].mxu0
        %2339 = vmatprep.mubr.f32.mxu0 0.0
        %2340 = vmatmul.mubr.f32.gmra.mrb[0].mxu0 %v2149
        %v2341 = vpop.f32.mrb[0].mxu0
        %v2342 = vadd.f32 0.0, %v2341
        %v2343 = vpop.f32.mrb[0].mxu0
        %2344 = vmatprep.mubr.f32.mxu0 0.0
        %2345 = vmatmul.mubr.f32.gmra.mrb[0].mxu0 %v2152
        %v2346 = vpop.f32.mrb[0].mxu0
        %v2347 = vadd.f32 0.0, %v2346
        %v2348 = vpop.f32.mrb[0].mxu0
        %2349 = vmatprep.mubr.f32.mxu0 0.0
        %2350 = vmatmul.mubr.f32.gmra.mrb[0].mxu0 %v2155
        %v2351 = vpop.f32.mrb[0].mxu0
        %v2352 = vadd.f32 0.0, %v2351
        %v2353 = vpop.f32.mrb[0].mxu0
        %2354 = vmatprep.mubr.f32.mxu0 0.0
        %2355 = vmatmul.mubr.f32.gmra.mrb[0].mxu0 %v2158
        %v2356 = vpop.f32.mrb[0].mxu0
        %v2357 = vadd.f32 0.0, %v2356
        %v2358 = vpop.f32.mrb[0].mxu0
        %2359 = vmatprep.mubr.f32.mxu0 0.0
        %2360 = vmatmul.mubr.f32.gmra.mrb[0].mxu0 %v2161
        %v2361 = vpop.f32.mrb[0].mxu0
        %v2362 = vadd.f32 0.0, %v2361
        %v2363 = vpop.f32.mrb[0].mxu0
        %2364 = vmatprep.mubr.f32.mxu0 0.0
        %2365 = vmatmul.mubr.f32.gmra.mrb[0].mxu0 %v2164
        %v2366 = vpop.f32.mrb[0].mxu0
        %v2367 = vadd.f32 0.0, %v2366
        %v2368 = vpop.f32.mrb[0].mxu0
        %2369 = vmatprep.mubr.f32.mxu0 0.0
        %2370 = vmatmul.mubr.f32.gmra.mrb[0].mxu0 %v2167
        %v2371 = vpop.f32.mrb[0].mxu0
        %v2372 = vadd.f32 0.0, %v2371
        %v2373 = vpop.f32.mrb[0].mxu0
        %2374 = vmatprep.mubr.f32.mxu0 0.0
        %2375 = vmatmul.mubr.f32.gmra.mrb[0].mxu0 %v2170
        %v2376 = vpop.f32.mrb[0].mxu0
        %v2377 = vadd.f32 0.0, %v2376
        %v2378 = vpop.f32.mrb[0].mxu0
        %2379 = vmatprep.mubr.f32.mxu0 0.0
        %2380 = vmatmul.mubr.f32.gmra.mrb[0].mxu0 %v2173
        %v2381 = vpop.f32.mrb[0].mxu0
        %v2382 = vadd.f32 0.0, %v2381
        %v2383 = vpop.f32.mrb[0].mxu0
        %2384 = vmatprep.mubr.f32.mxu0 0.0
        %2385 = vmatmul.mubr.f32.gmra.mrb[0].mxu0 %v2176
        %v2386 = vpop.f32.mrb[0].mxu0
        %v2387 = vadd.f32 0.0, %v2386
        %v2388 = vpop.f32.mrb[0].mxu0
        %2389 = vmatprep.mubr.f32.mxu0 0.0
        %2390 = vmatmul.mubr.f32.gmra.mrb[0].mxu0 %v2179
        %v2391 = vpop.f32.mrb[0].mxu0
        %v2392 = vadd.f32 0.0, %v2391
        %v2393 = vpop.f32.mrb[0].mxu0
        %2394 = vmatprep.mubr.f32.mxu0 0.0
        %2395 = vmatmul.mubr.f32.gmra.mrb[0].mxu0 %v2182
        %v2396 = vpop.f32.mrb[0].mxu0
        %v2397 = vadd.f32 0.0, %v2396
        %v2398 = vpop.f32.mrb[0].mxu0
        %2399 = vmatprep.mubr.f32.mxu0 0.0
        %2400 = vmatmul.mubr.f32.gmra.mrb[0].mxu0 %v2185
        %v2401 = vpop.f32.mrb[0].mxu0
        %v2402 = vadd.f32 0.0, %v2401
        %v2403 = vpop.f32.mrb[0].mxu0
        %2404 = vmatprep.mubr.f32.mxu0 0.0
        %2405 = vmatmul.mubr.f32.gmra.mrb[0].mxu0 %v2188
        %v2406 = vpop.f32.mrb[0].mxu0
        %v2407 = vadd.f32 0.0, %v2406
        %v2408 = vpop.f32.mrb[0].mxu0
        %2409 = vmatprep.mubr.f32.mxu0 0.0
        %2410 = vmatmul.mubr.f32.gmra.mrb[0].mxu0 %v2191
        %v2411 = vpop.f32.mrb[0].mxu0
        %v2412 = vadd.f32 0.0, %v2411
        %v2413 = vpop.f32.mrb[0].mxu0
        %2414 = vmatprep.mubr.f32.mxu0 0.0
        %2415 = vmatmul.mubr.f32.gmra.mrb[0].mxu0 %v2194
        %v2416 = vpop.f32.mrb[0].mxu0
        %v2417 = vadd.f32 0.0, %v2416
        %v2418 = vpop.f32.mrb[0].mxu0
        %2419 = vmatprep.mubr.f32.mxu0 0.0
        %2420 = vmatmul.mubr.f32.gmra.mrb[0].mxu0 %v2197
        %v2421 = vpop.f32.mrb[0].mxu0
        %v2422 = vadd.f32 0.0, %v2421
        %v2423 = vpop.f32.mrb[0].mxu0
        %2424 = vmatprep.mubr.f32.mxu0 0.0
        %2425 = vmatmul.mubr.f32.gmra.mrb[0].mxu0 %v2200
        %v2426 = vpop.f32.mrb[0].mxu0
        %v2427 = vadd.f32 0.0, %v2426
        %v2428 = vpop.f32.mrb[0].mxu0
        %2429 = vdwg.mxu0
        %2430 = vst.msk [vmem:[%s7] sm:$0xff] %vm1047, %v2272
        %2431 = vst.msk [vmem:[%s7 + $0x8] sm:$0xff] %vm1047, %v2277
        %2432 = vst.msk [vmem:[%s7 + $0x10] sm:$0xff] %vm1047, %v2282
        %2433 = vst.msk [vmem:[%s7 + $0x18] sm:$0xff] %vm1047, %v2287
        %2434 = vst.msk [vmem:[%s7 + $0x20] sm:$0xff] %vm1047, %v2292
        %2435 = vst.msk [vmem:[%s7 + $0x28] sm:$0xff] %vm1047, %v2297
        %2436 = vst.msk [vmem:[%s7 + $0x30] sm:$0xff] %vm1047, %v2302
        %2437 = vst.msk [vmem:[%s7 + $0x38] sm:$0xff] %vm1047, %v2307
        %2438 = vst.msk [vmem:[%s7 + $0x40] sm:$0xff] %vm1047, %v2312
        %2439 = vst.msk [vmem:[%s7 + $0x48] sm:$0xff] %vm1047, %v2317
        %2440 = vst.msk [vmem:[%s7 + $0x50] sm:$0xff] %vm1047, %v2322
        %2441 = vst.msk [vmem:[%s7 + $0x58] sm:$0xff] %vm1047, %v2327
        %2442 = vst.msk [vmem:[%s7 + $0x60] sm:$0xff] %vm1047, %v2332
        %2443 = vst.msk [vmem:[%s7 + $0x68] sm:$0xff] %vm1047, %v2337
        %2444 = vst.msk [vmem:[%s7 + $0x70] sm:$0xff] %vm1047, %v2342
        %2445 = vst.msk [vmem:[%s7 + $0x78] sm:$0xff] %vm1047, %v2347
        %2446 = vst.msk [vmem:[%s7 + $0x80] sm:$0xff] %vm1047, %v2352
        %2447 = vst.msk [vmem:[%s7 + $0x88] sm:$0xff] %vm1047, %v2357
        %2448 = vst.msk [vmem:[%s7 + $0x90] sm:$0xff] %vm1047, %v2362
        %2449 = vst.msk [vmem:[%s7 + $0x98] sm:$0xff] %vm1047, %v2367
        %2450 = vst.msk [vmem:[%s7 + $0xa0] sm:$0xff] %vm1047, %v2372
        %2451 = vst.msk [vmem:[%s7 + $0xa8] sm:$0xff] %vm1047, %v2377
        %2452 = vst.msk [vmem:[%s7 + $0xb0] sm:$0xff] %vm1047, %v2382
        %2453 = vst.msk [vmem:[%s7 + $0xb8] sm:$0xff] %vm1047, %v2387
        %2454 = vst.msk [vmem:[%s7 + $0xc0] sm:$0xff] %vm1047, %v2392
        %2455 = vst.msk [vmem:[%s7 + $0xc8] sm:$0xff] %vm1047, %v2397
        %2456 = vst.msk [vmem:[%s7 + $0xd0] sm:$0xff] %vm1047, %v2402
        %2457 = vst.msk [vmem:[%s7 + $0xd8] sm:$0xff] %vm1047, %v2407
        %2458 = vst.msk [vmem:[%s7 + $0xe0] sm:$0xff] %vm1047, %v2412
        %2459 = vst.msk [vmem:[%s7 + $0xe8] sm:$0xff] %vm1047, %v2417
        %2460 = vst.msk [vmem:[%s7 + $0xf0] sm:$0xff] %vm1047, %v2422
        %2461 = vst.msk [vmem:[%s7 + $0xf8] sm:$0xff] %vm1047, %v2427
      $region52: #{tpu_custom_call.1} parent=43 // pred_fallthru
        _
      // Predicated region
      $region53: #{tpu_custom_call.1} parent=43 // pred_check
        %p2462 = pneg %p177
      $region54: #{tpu_custom_call.1} parent=43 // pred_check_branch
        %2464 = sbr.rel (%p2462) target = $region56
      $region55: #{tpu_custom_call.1} parent=43 // pred_region
        _
      $region56: #{tpu_custom_call.1} parent=43 // pred_fallthru
        _
      // Predicated region
      $region57: #{tpu_custom_call.1} parent=43 // pred_check
        %p2465 = pneg %p198
      $region58: #{tpu_custom_call.1} parent=43 // pred_check_branch
        %2467 = sbr.rel (%p2465) target = $region60
      $region59: #{tpu_custom_call.1} parent=43 // pred_region
        _
      $region60: #{tpu_custom_call.1} parent=43 // pred_fallthru
        _
      // Predicated region
      $region61: #{tpu_custom_call.1} parent=43 // pred_check
        %p2468 = pneg %p177
      $region62: #{tpu_custom_call.1} parent=43 // pred_check_branch
        %2470 = sbr.rel (%p2468) target = $region64
      $region63: #{tpu_custom_call.1} parent=43 // pred_region
        _
      $region64: #{tpu_custom_call.1} parent=43 // pred_fallthru
        _
      // Predicated region
      $region65: #{tpu_custom_call.1} parent=43 // pred_check
        %p2471 = pneg %p198
      $region66: #{tpu_custom_call.1} parent=43 // pred_check_branch
        %2473 = sbr.rel (%p2471) target = $region68
      $region67: #{tpu_custom_call.1} parent=43 // pred_region
        _
      $region68: #{tpu_custom_call.1} parent=43 // pred_fallthru
        _
    $region44: #{tpu_custom_call.1} parent=5 // pred_fallthru
      _
    %p2474 = scmp.le.s32.totalorder 2, %s14
    // Predicated region
    $region69: #{tpu_custom_call.1} parent=5 // pred_check
      %p2475 = pneg %p2474
    $region70: #{tpu_custom_call.1} parent=5 // pred_check_branch
      %2477 = sbr.rel (%p2475) target = $region72
    $region71: #{tpu_custom_call.1} parent=5 // pred_region
      %s2478 = ssub.s32 %s14, 2
    $region72: #{tpu_custom_call.1} parent=5 // pred_fallthru
      _
  $region6: #{tpu_custom_call.1} parent=0 // loop_footer
    %s18 = sadd.s32 1, %s14
  $region7: #{tpu_custom_call.1} parent=0 // loop_footer_branch
    %13 = sbr.rel target = $region3
  $region8: #{tpu_custom_call.1} parent=0 // loop_exit
    _

</llo_original>
